<compile_context>
chip_gen: v6e
topology: v6e:2x2x1
jax: 0.10.0
libtpu: 0.0.40
codegen_flags: <defaults>
</compile_context>

<pallas_src>
import numpy as np

import jax
import jax.numpy as jnp
from jax import lax
from jax.experimental import pallas as pl
from jax.experimental.pallas import tpu as pltpu


# ----------------------------- small helpers -----------------------------

def _round_up(x, m):
    return ((x + m - 1) // m) * m


def _nbytes(shape, itemsize):
    return int(np.prod(shape)) * int(itemsize)


def choose_row_tile(H, W, target_lanes):
    """Largest row count th dividing H with th*W a multiple of 128 and <= target_lanes."""
    best = 0
    for th in range(1, H + 1):
        if H % th == 0 and (th * W) % 128 == 0 and th * W <= target_lanes:
            best = th
    # Fallback: a single full-extent tile (block last dim == HW is always legal).
    # TODO(synk): at production sizes pad W so some th*W is a multiple of 128.
    return best if best > 0 else H


def _block_spec(shape, index_map, single_buffer=False):
    """BlockSpec; optionally request single-buffering for grid-invariant operands."""
    if single_buffer:
        try:
            return pl.BlockSpec(shape, index_map, pipeline_mode=pl.Buffered(1))
        except (TypeError, ValueError):   # older JAX without pipeline_mode / Buffered(1)
            pass
    return pl.BlockSpec(shape, index_map)


def _vmem_limit(term_bytes):
    est = int(sum(term_bytes) * 1.5) + (2 << 20)
    return int(min(max(est, 8 << 20), 48 << 20))


# ----------------------------- kernel A: pyramid head -----------------------------
# Per batch element: adaptive avg-pool for ALL bins as one matmul, all per-bin
# 1x1 convs (BN scale folded) stacked into one matmul + bias + ReLU, and a
# zero-padded bf16 copy of the input (halo columns) for the body kernel.

def make_head_kernel(cin, HW, HWP, HALO, BBP, poffs, cout, nbins):
    def kernel(x_ref, pallT_ref, w1_ref, b1_ref, y_ref, xpad_ref):
        x32 = x_ref[0]                                    # (cin, HW) f32
        xb = x32.astype(jnp.bfloat16)

        # padded bf16 input copy: [0:HALO)=0, [HALO:HALO+HW)=x, rest 0
        xpad_ref[0] = jnp.zeros((cin, HWP), jnp.bfloat16)
        xpad_ref[0, :, HALO:HALO + HW] = xb

        # all pyramid pools in ONE MXU matmul (bin column groups are 8-aligned, zero padded)
        pooled = jnp.dot(xb, pallT_ref[...],
                         preferred_element_type=jnp.float32)          # (cin, SBB) f32

        # all per-bin 1x1 convs stacked into ONE matmul; keep the diagonal blocks
        z = jnp.dot(w1_ref[...], pooled.astype(jnp.bfloat16),
                    preferred_element_type=jnp.float32)               # (nbins*cout, SBB) f32
        z = jnp.maximum(z + b1_ref[...], 0.0)                         # folded BN bias + ReLU
        for b in range(nbins):
            blk = z[b * cout:(b + 1) * cout, poffs[b]:poffs[b] + BBP[b]]
            y_ref[0, :, poffs[b]:poffs[b] + BBP[b]] = blk.astype(y_ref.dtype)
    return kernel


# ----------------------------- kernel B: upsample + concat + 3x3 bottleneck -----------------------------
# Per (batch, row-tile): build the (ctot, TILE+2*HALO) concat slab in VMEM
# (input rows + per-bin bilinear upsample as matmuls against the halo-padded
# upsample matrices), then 3x3 conv as nine per-tap matmuls with left/right
# border masks, accumulate, BN bias + ReLU.

def make_body_kernel(cin, cout, ctot, nbins, W, HALO, TILE, SLAB, BBP, poffs):
    def kernel(xpad_ref, y_ref, uallT_ref, w9_ref, b9_ref, mask_ref, o_ref, cat_ref):
        start = pl.program_id(1) * TILE          # offset into the padded flat-spatial axis
        if TILE % 128 == 0:
            start = pl.multiple_of(start, 128)

        # ---- concat slab with one-row (+1 pixel) halo on each side ----
        cat_ref[0:cin, :] = xpad_ref[0, :, pl.ds(start, SLAB)]
        for b in range(nbins):
            yb = y_ref[0, :, poffs[b]:poffs[b] + BBP[b]]                       # (cout, BBP) bf16
            ub = uallT_ref[poffs[b]:poffs[b] + BBP[b], pl.ds(start, SLAB)]     # (BBP, SLAB) bf16
            up = jnp.dot(yb, ub, preferred_element_type=jnp.float32)           # (cout, SLAB) f32
            cat_ref[cin + b * cout:cin + (b + 1) * cout, :] = up.astype(cat_ref.dtype)

        lmask = mask_ref[0:1, :]     # (1, TILE): 0 where image col == 0
        rmask = mask_ref[1:2, :]     # (1, TILE): 0 where image col == W-1

        # ---- 3x3 conv: per-tap matmul + mask + accumulate (no (9*cout, TILE) slab) ----
        acc = jnp.dot(w9_ref[4 * cout:5 * cout, :], cat_ref[:, HALO:HALO + TILE],
                      preferred_element_type=jnp.float32)              # centre tap (k=4)
        for k in range(9):
            if k == 4:
                continue
            dy, dx = k // 3 - 1, k % 3 - 1
            s = dy * W + dx
            c = jnp.dot(w9_ref[k * cout:(k + 1) * cout, :],
                        cat_ref[:, HALO + s:HALO + s + TILE],
                        preferred_element_type=jnp.float32)
            # vertical out-of-image taps hit the zero halo columns -> no mask needed;
            # only the left/right image-border column wrap needs masking.
            if dx == -1:
                c = c * lmask
            elif dx == 1:
                c = c * rmask
            acc = acc + c

        out = jnp.maximum(acc + b9_ref[...], 0.0)    # folded BN bias + ReLU
        # Dropout2d(0.1) is identity in eval mode.
        o_ref[0] = out.astype(o_ref.dtype)
    return kernel


# ----------------------------- wrapper -----------------------------

def psp_forward(x_nchw, kp, *, tile_lanes=1024, single_buffer_invariants=True):
    """Fused PSP forward. x_nchw: (N, C, H, W) f32 -> (N, cout, H, W) f32."""
    N, C, H, W = x_nchw.shape
    assert (C, H, W) == (kp["cin"], kp["H"], kp["W"])
    HW, HWP, HALO = kp["HW"], kp["HWP"], kp["HALO"]
    SBB, BBP, poffs = kp["SBB"], kp["BBP"], kp["poffs"]
    cout, ctot, nbins = kp["cout"], kp["ctot"], kp["nbins"]
    sb = single_buffer_invariants

    xf = x_nchw.reshape(N, C, HW)    # NCHW -> (N, C, HW): pure reshape, no transpose, no cast

    def inv(arr):
        return _block_spec(arr.shape, lambda *_: (0,) * arr.ndim, single_buffer=sb)

    # -------- kernel A: pooling + stacked 1x1 conv + padded bf16 input copy --------
    head = make_head_kernel(C, HW, HWP, HALO, BBP, poffs, cout, nbins)
    flops_a = 2 * N * C * HW * SBB + 2 * N * (nbins * cout) * C * SBB
    bytes_a = (N * _nbytes((C, HW), 4) + _nbytes(kp["pallT"].shape, 2)
               + _nbytes(kp["w1stk"].shape, 2) + _nbytes(kp["b1stk"].shape, 4)
               + N * _nbytes((cout, SBB), 2) + N * _nbytes((C, HWP), 2))
    nb = 1 if sb else 2
    vmem_a = _vmem_limit([
        2 * _nbytes((C, HW), 4),
        nb * (_nbytes(kp["pallT"].shape, 2) + _nbytes(kp["w1stk"].shape, 2)
              + _nbytes(kp["b1stk"].shape, 4)),
        2 * _nbytes((cout, SBB), 2),
        2 * _nbytes((C, HWP), 2),
        4 * _nbytes((C, SBB), 4),                 # in-kernel f32 temporaries
    ])
    y_all, x_pad = pl.pallas_call(
        head,
        out_shape=(jax.ShapeDtypeStruct((N, cout, SBB), jnp.bfloat16),
                   jax.ShapeDtypeStruct((N, C, HWP), jnp.bfloat16)),
        grid=(N,),
        in_specs=[pl.BlockSpec((1, C, HW), lambda n: (n, 0, 0)),
                  inv(kp["pallT"]), inv(kp["w1stk"]), inv(kp["b1stk"])],
        out_specs=(pl.BlockSpec((1, cout, SBB), lambda n: (n, 0, 0)),
                   pl.BlockSpec((1, C, HWP), lambda n: (n, 0, 0))),
        compiler_params=pltpu.CompilerParams(
            dimension_semantics=("parallel",), vmem_limit_bytes=vmem_a),
        cost_estimate=pl.CostEstimate(flops=flops_a, transcendentals=0,
                                      bytes_accessed=bytes_a),
    )(xf, kp["pallT"], kp["w1stk"], kp["b1stk"])

    # -------- kernel B: per-row-tile upsample + concat + 3x3 conv --------
    TH = choose_row_tile(H, W, tile_lanes)
    T = H // TH
    TILE = TH * W
    SLAB = TILE + 2 * HALO
    body = make_body_kernel(C, cout, ctot, nbins, W, HALO, TILE, SLAB, BBP, poffs)
    flops_b = N * T * (2 * cout * SLAB * SBB + 18 * cout * ctot * TILE)
    bytes_b = (N * _nbytes((C, HWP), 2) + N * _nbytes((cout, SBB), 2)
               + _nbytes(kp["uallT"].shape, 2) + _nbytes(kp["w9"].shape, 2)
               + _nbytes(kp["b9"].shape, 4) + _nbytes(kp["colmask"].shape, 4)
               + N * _nbytes((cout, HW), 4))
    vmem_b = _vmem_limit([
        2 * _nbytes((C, HWP), 2),
        2 * _nbytes((cout, SBB), 2),
        nb * (_nbytes(kp["uallT"].shape, 2) + _nbytes(kp["w9"].shape, 2)
              + _nbytes(kp["b9"].shape, 4)),
        2 * _nbytes((2, TILE), 4),
        2 * _nbytes((cout, TILE), 4),
        _nbytes((ctot, SLAB), 2),                 # cat scratch
        4 * _nbytes((cout, SLAB), 4),             # per-tap / upsample f32 temporaries
    ])
    out = pl.pallas_call(
        body,
        # TODO(synk): emit bf16 here if the downstream consumer accepts it (halves writeback).
        out_shape=jax.ShapeDtypeStruct((N, cout, HW), jnp.float32),
        grid=(N, T),
        in_specs=[pl.BlockSpec((1, C, HWP), lambda n, t: (n, 0, 0)),
                  pl.BlockSpec((1, cout, SBB), lambda n, t: (n, 0, 0)),
                  inv(kp["uallT"]), inv(kp["w9"]), inv(kp["b9"]),
                  pl.BlockSpec((2, TILE), lambda n, t: (0, t))],
        out_specs=pl.BlockSpec((1, cout, TILE), lambda n, t: (n, 0, t)),
        scratch_shapes=[pltpu.VMEM((ctot, SLAB), jnp.bfloat16)],
        # both axes parallel: batch AND row-tiles shard across v7x's 2 TensorCores
        compiler_params=pltpu.CompilerParams(
            dimension_semantics=("parallel", "parallel"), vmem_limit_bytes=vmem_b),
        cost_estimate=pl.CostEstimate(flops=flops_b, transcendentals=0,
                                      bytes_accessed=bytes_b),
    )(x_pad, y_all, kp["uallT"], kp["w9"], kp["b9"], kp["colmask"])
    return out.reshape(N, cout, H, W)


# ----------------------------- linear-map constructors -----------------------------

def adaptive_pool_matrix(out_size, in_size):
    """PyTorch AdaptiveAvgPool-style averaging matrix (out_size, in_size)."""
    m = np.zeros((out_size, in_size), np.float32)
    for p in range(out_size):
        start = (p * in_size) // out_size
        end = -((-(p + 1) * in_size) // out_size)  # ceil
        m[p, start:end] = 1.0 / (end - start)
    return m


def bilinear_up_matrix(out_size, in_size):
    """Bilinear interpolation matrix (out_size, in_size), align_corners=True."""
    m = np.zeros((out_size, in_size), np.float32)
    if in_size == 1:
        m[:, 0] = 1.0
        return m
    for i in range(out_size):
        src = 0.0 if out_size == 1 else i * (in_size - 1) / (out_size - 1)
        i0 = int(np.floor(src))
        i1 = min(i0 + 1, in_size - 1)
        f = src - i0
        m[i, i0] += 1.0 - f
        m[i, i1] += f
    return m


def spatial_matrix_2d(my, mx):
    """Combine per-axis maps into one map over the flattened (H*W) spatial axis."""
    return np.kron(my, mx).astype(np.float32)


def fold_bn(gamma, beta, mean, var, eps=1e-5):
    scale = gamma / jnp.sqrt(var + eps)
    return scale, beta - mean * scale


# ----------------------------- parameter init / prep -----------------------------

def init_psp_params(key, in_channels, bin_sizes, H, W):
    nbins = len(bin_sizes)
    cout = in_channels // nbins
    keys = iter(jax.random.split(key, 5 * nbins + 5))
    stages = []
    for b in bin_sizes:
        P = jnp.asarray(spatial_matrix_2d(adaptive_pool_matrix(b, H),
                                          adaptive_pool_matrix(b, W)))      # (b*b, H*W)
        U = jnp.asarray(spatial_matrix_2d(bilinear_up_matrix(H, b),
                                          bilinear_up_matrix(W, b)))        # (H*W, b*b)
        stages.append(dict(
            P=P, U=U,
            w1=0.05 * jax.random.normal(next(keys), (cout, in_channels), jnp.float32),
            gamma=0.5 + jax.random.uniform(next(keys), (cout,), jnp.float32),
            beta=0.1 * jax.random.normal(next(keys), (cout,), jnp.float32),
            mean=0.1 * jax.random.normal(next(keys), (cout,), jnp.float32),
            var=0.5 + jax.random.uniform(next(keys), (cout,), jnp.float32)))
    ctot = in_channels + cout * nbins
    return dict(
        bin_sizes=tuple(bin_sizes), cin=in_channels, cout=cout, H=H, W=W, stages=stages,
        bneck_w=0.05 * jax.random.normal(next(keys), (9, cout, ctot), jnp.float32),
        bneck_gamma=0.5 + jax.random.uniform(next(keys), (cout,), jnp.float32),
        bneck_beta=0.1 * jax.random.normal(next(keys), (cout,), jnp.float32),
        bneck_mean=0.1 * jax.random.normal(next(keys), (cout,), jnp.float32),
        bneck_var=0.5 + jax.random.uniform(next(keys), (cout,), jnp.float32))


def prepare_kernel_params(params):
    """Fold BN into conv weights, build stacked/padded pool, upsample and mask matrices."""
    bin_sizes = params["bin_sizes"]
    cin, cout = params["cin"], params["cout"]
    H, W = params["H"], params["W"]
    HW = H * W
    nbins = len(bin_sizes)
    ctot = cin + nbins * cout
    HALO = W + 1                             # one image row + one pixel covers all 3x3 taps
    HWP = _round_up(HW + 2 * HALO, 128)      # padded flat-spatial extent (lane-dense)

    bbs = [b * b for b in bin_sizes]
    BBP = [_round_up(bb, 8) for bb in bbs]   # 8-lane-aligned per-bin column groups
    poffs = np.concatenate([[0], np.cumsum(BBP)]).astype(int).tolist()
    SBB = poffs[-1]

    pallT = np.zeros((HW, SBB), np.float32)    # stacked pooling matrices (transposed)
    uallT = np.zeros((SBB, HWP), np.float32)   # stacked upsample matrices (transposed, halo pad)
    w1stk = np.zeros((nbins * cout, cin), np.float32)
    b1stk = np.zeros((nbins * cout, 1), np.float32)
    for i, st in enumerate(params["stages"]):
        bb, off = bbs[i], poffs[i]
        pallT[:, off:off + bb] = np.asarray(st["P"]).T
        uallT[off:off + bb, HALO:HALO + HW] = np.asarray(st["U"]).T
        scale, bias = fold_bn(st["gamma"], st["beta"], st["mean"], st["var"])
        w1stk[i * cout:(i + 1) * cout, :] = np.asarray(st["w1"] * scale[:, None])
        b1stk[i * cout:(i + 1) * cout, 0] = np.asarray(bias)

    scale9, bias9 = fold_bn(params["bneck_gamma"], params["bneck_beta"],
                            params["bneck_mean"], params["bneck_var"])
    w9 = np.asarray(params["bneck_w"] * scale9[None, :, None]).reshape(9 * cout, ctot)
    b9 = np.asarray(bias9).reshape(cout, 1).astype(np.float32)

    col = np.arange(HW) % W
    colmask = np.stack([(col > 0), (col < W - 1)]).astype(np.float32)   # (2, HW)

    return dict(
        bin_sizes=bin_sizes, cin=cin, cout=cout, ctot=ctot, nbins=nbins,
        H=H, W=W, HW=HW, HWP=HWP, HALO=HALO, SBB=SBB, BBP=BBP, poffs=poffs,
        pallT=jnp.asarray(pallT, jnp.bfloat16),
        uallT=jnp.asarray(uallT, jnp.bfloat16),
        w1stk=jnp.asarray(w1stk, jnp.bfloat16),
        b1stk=jnp.asarray(b1stk, jnp.float32),
        w9=jnp.asarray(w9, jnp.bfloat16),
        b9=jnp.asarray(b9, jnp.float32),
        colmask=jnp.asarray(colmask, jnp.float32))


# ----------------------------- pure-JAX reference -----------------------------

def psp_reference(x_nchw, params):
    N, C, H, W = x_nchw.shape
    HW = H * W
    cout = params["cout"]
    nbins = len(params["bin_sizes"])
    ctot = C + nbins * cout
    hi = lax.Precision.HIGHEST

    xf = x_nchw.reshape(N, C, HW)
    pyr = [x_nchw]
    for st in params["stages"]:
        pooled = jnp.einsum("ncs,ps->ncp", xf, st["P"], precision=hi)
        z = jnp.einsum("oc,ncp->nop", st["w1"], pooled, precision=hi)
        scale, bias = fold_bn(st["gamma"], st["beta"], st["mean"], st["var"])
        y = jnp.maximum(z * scale[None, :, None] + bias[None, :, None], 0.0)
        up = jnp.einsum("sp,nop->nos", st["U"], y, precision=hi)
        pyr.append(up.reshape(N, cout, H, W))
    cat = jnp.concatenate(pyr, axis=1)

    cat_nhwc = jnp.transpose(cat, (0, 2, 3, 1))
    w_hwio = jnp.transpose(params["bneck_w"].reshape(3, 3, cout, ctot), (0, 1, 3, 2))
    conv = lax.conv_general_dilated(cat_nhwc, w_hwio, (1, 1), "SAME",
                                    dimension_numbers=("NHWC", "HWIO", "NHWC"),
                                    precision=hi)
    scale9, bias9 = fold_bn(params["bneck_gamma"], params["bneck_beta"],
                            params["bneck_mean"], params["bneck_var"])
    y = jnp.maximum(conv * scale9.reshape(1, 1, 1, -1) + bias9.reshape(1, 1, 1, -1), 0.0)
    return jnp.transpose(y, (0, 3, 1, 2))


# ----------------------------- main -----------------------------

if __name__ == "__main__":
    key = jax.random.PRNGKey(0)
    k_x, k_p = jax.random.split(key)

    N, C, H, W = 2, 32, 16, 16
    bin_sizes = (1, 2, 3, 6)          # standard PSPNet bins; out_channels = 32 // 4 = 8

    x = jax.random.normal(k_x, (N, C, H, W), jnp.float32)
    params = init_psp_params(k_p, C, bin_sizes, H, W)
    kparams = prepare_kernel_params(params)

    # tile_lanes=128 -> two row-tiles at this toy size, exercising the halo/tiling path.
    try:
        out = jax.block_until_ready(psp_forward(x, kparams, tile_lanes=128))
    except Exception:
        # fallback without single-buffered invariants (older JAX pipeline_mode support)
        out = jax.block_until_ready(
            psp_forward(x, kparams, tile_lanes=128, single_buffer_invariants=False))
    ref = jax.block_until_ready(psp_reference(x, params))

    assert out.shape == (N, C // len(bin_sizes), H, W), out.shape
    np.testing.assert_allclose(np.asarray(out), np.asarray(ref), rtol=3e-2, atol=3e-2)

    print("KERNEL_OK")
</pallas_src>

<mosaic_0001>
module attributes {stable_mosaic.version = 11 : i64} {
  func.func @kernel(%arg0: i32, %arg1: memref<1x32x256xf32, #tpu.memory_space<vmem>>, %arg2: memref<256x72xbf16, #tpu.memory_space<vmem>>, %arg3: memref<32x32xbf16, #tpu.memory_space<vmem>>, %arg4: memref<32x1xf32, #tpu.memory_space<vmem>>, %arg5: memref<1x8x72xbf16, #tpu.memory_space<vmem>>, %arg6: memref<1x32x384xbf16, #tpu.memory_space<vmem>>) attributes {dimension_semantics = [#tpu.dimension_semantics<parallel>], iteration_bounds = array<i64: 2>, scalar_prefetch = 0 : i64, scratch_operands = 0 : i64, tpu.core_type = #tpu.core_type<tc>, window_params = [{transform_indices = @transform_0, window_bounds = array<i64: 1, 32, 256>}, {pipeline_mode = #tpu.pipeline_mode<synchronous>, transform_indices = @transform_1, window_bounds = array<i64: 256, 72>}, {pipeline_mode = #tpu.pipeline_mode<synchronous>, transform_indices = @transform_2, window_bounds = array<i64: 32, 32>}, {pipeline_mode = #tpu.pipeline_mode<synchronous>, transform_indices = @transform_3, window_bounds = array<i64: 32, 1>}, {transform_indices = @transform_4, window_bounds = array<i64: 1, 8, 72>}, {transform_indices = @transform_5, window_bounds = array<i64: 1, 32, 384>}]} {
    %c0 = arith.constant 0 : index
    %c0_0 = arith.constant 0 : index
    %c0_1 = arith.constant 0 : index
    %0 = vector.load %arg1[%c0, %c0_0, %c0_1] : memref<1x32x256xf32, #tpu.memory_space<vmem>>, vector<1x32x256xf32>
    %1 = vector.shape_cast %0 : vector<1x32x256xf32> to vector<32x256xf32>
    %2 = arith.truncf %1 : vector<32x256xf32> to vector<32x256xbf16>
    %cst = arith.constant 0.000000e+00 : bf16
    %3 = vector.broadcast %cst : bf16 to vector<32x384xbf16>
    %c0_2 = arith.constant 0 : index
    %c0_3 = arith.constant 0 : index
    %c0_4 = arith.constant 0 : index
    %4 = vector.load %arg6[%c0_2, %c0_3, %c0_4] : memref<1x32x384xbf16, #tpu.memory_space<vmem>>, vector<1x32x384xbf16>
    %5 = vector.shape_cast %4 : vector<1x32x384xbf16> to vector<32x384xbf16>
    %6 = vector.shape_cast %3 : vector<32x384xbf16> to vector<1x32x384xbf16>
    tpu.vector_store %arg6[%c0_2, %c0_3, %c0_4], %6 {strides = array<i32>} : memref<1x32x384xbf16, #tpu.memory_space<vmem>>, vector<1x32x384xbf16>,
    %c0_5 = arith.constant 0 : index
    %c0_6 = arith.constant 0 : index
    %c17 = arith.constant 17 : index
    %7 = vector.load %arg6[%c0_5, %c0_6, %c17] : memref<1x32x384xbf16, #tpu.memory_space<vmem>>, vector<1x32x256xbf16>
    %8 = vector.shape_cast %7 : vector<1x32x256xbf16> to vector<32x256xbf16>
    %9 = vector.shape_cast %2 : vector<32x256xbf16> to vector<1x32x256xbf16>
    tpu.vector_store %arg6[%c0_5, %c0_6, %c17], %9 {strides = array<i32>} : memref<1x32x384xbf16, #tpu.memory_space<vmem>>, vector<1x32x256xbf16>,
    %c0_7 = arith.constant 0 : index
    %c0_8 = arith.constant 0 : index
    %10 = vector.load %arg2[%c0_7, %c0_8] : memref<256x72xbf16, #tpu.memory_space<vmem>>, vector<256x72xbf16>
    %cst_9 = arith.constant dense<0.000000e+00> : vector<32x72xf32>
    %11 = tpu.matmul %2, %10, %cst_9 {dimension_numbers = #tpu.dot_dimension_numbers<[1], [0], [0], [1], [0, 0, 1, 1], [], []>} : vector<32x256xbf16>, vector<256x72xbf16>, vector<32x72xf32> -> vector<32x72xf32>
    %c0_10 = arith.constant 0 : index
    %c0_11 = arith.constant 0 : index
    %12 = vector.load %arg3[%c0_10, %c0_11] : memref<32x32xbf16, #tpu.memory_space<vmem>>, vector<32x32xbf16>
    %13 = arith.truncf %11 : vector<32x72xf32> to vector<32x72xbf16>
    %cst_12 = arith.constant dense<0.000000e+00> : vector<32x72xf32>
    %14 = tpu.matmul %12, %13, %cst_12 {dimension_numbers = #tpu.dot_dimension_numbers<[1], [0], [0], [1], [0, 0, 1, 1], [], []>} : vector<32x32xbf16>, vector<32x72xbf16>, vector<32x72xf32> -> vector<32x72xf32>
    %c0_13 = arith.constant 0 : index
    %c0_14 = arith.constant 0 : index
    %15 = vector.load %arg4[%c0_13, %c0_14] : memref<32x1xf32, #tpu.memory_space<vmem>>, vector<32x1xf32>
    %16 = vector.broadcast %15 : vector<32x1xf32> to vector<32x72xf32>
    %17 = arith.addf %14, %16 : vector<32x72xf32>
    %cst_15 = arith.constant 0.000000e+00 : f32
    %18 = vector.broadcast %cst_15 : f32 to vector<32x72xf32>
    %19 = arith.maximumf %17, %18 : vector<32x72xf32>
    %20 = vector.extract_strided_slice %19 {offsets = [0, 0], sizes = [8, 8], strides = [1, 1]} : vector<32x72xf32> to vector<8x8xf32>
    %21 = arith.truncf %20 : vector<8x8xf32> to vector<8x8xbf16>
    %c0_16 = arith.constant 0 : index
    %c0_17 = arith.constant 0 : index
    %c0_18 = arith.constant 0 : index
    %22 = vector.load %arg5[%c0_16, %c0_17, %c0_18] : memref<1x8x72xbf16, #tpu.memory_space<vmem>>, vector<1x8x8xbf16>
    %23 = vector.shape_cast %22 : vector<1x8x8xbf16> to vector<8x8xbf16>
    %24 = vector.shape_cast %21 : vector<8x8xbf16> to vector<1x8x8xbf16>
    tpu.vector_store %arg5[%c0_16, %c0_17, %c0_18], %24 {strides = array<i32>} : memref<1x8x72xbf16, #tpu.memory_space<vmem>>, vector<1x8x8xbf16>,
    %25 = vector.extract_strided_slice %19 {offsets = [8, 8], sizes = [8, 8], strides = [1, 1]} : vector<32x72xf32> to vector<8x8xf32>
    %26 = arith.truncf %25 : vector<8x8xf32> to vector<8x8xbf16>
    %c0_19 = arith.constant 0 : index
    %c0_20 = arith.constant 0 : index
    %c8 = arith.constant 8 : index
    %27 = vector.load %arg5[%c0_19, %c0_20, %c8] : memref<1x8x72xbf16, #tpu.memory_space<vmem>>, vector<1x8x8xbf16>
    %28 = vector.shape_cast %27 : vector<1x8x8xbf16> to vector<8x8xbf16>
    %29 = vector.shape_cast %26 : vector<8x8xbf16> to vector<1x8x8xbf16>
    tpu.vector_store %arg5[%c0_19, %c0_20, %c8], %29 {strides = array<i32>} : memref<1x8x72xbf16, #tpu.memory_space<vmem>>, vector<1x8x8xbf16>,
    %30 = vector.extract_strided_slice %19 {offsets = [16, 16], sizes = [8, 16], strides = [1, 1]} : vector<32x72xf32> to vector<8x16xf32>
    %31 = arith.truncf %30 : vector<8x16xf32> to vector<8x16xbf16>
    %c0_21 = arith.constant 0 : index
    %c0_22 = arith.constant 0 : index
    %c16 = arith.constant 16 : index
    %32 = vector.load %arg5[%c0_21, %c0_22, %c16] : memref<1x8x72xbf16, #tpu.memory_space<vmem>>, vector<1x8x16xbf16>
    %33 = vector.shape_cast %32 : vector<1x8x16xbf16> to vector<8x16xbf16>
    %34 = vector.shape_cast %31 : vector<8x16xbf16> to vector<1x8x16xbf16>
    tpu.vector_store %arg5[%c0_21, %c0_22, %c16], %34 {strides = array<i32>} : memref<1x8x72xbf16, #tpu.memory_space<vmem>>, vector<1x8x16xbf16>,
    %35 = vector.extract_strided_slice %19 {offsets = [24, 32], sizes = [8, 40], strides = [1, 1]} : vector<32x72xf32> to vector<8x40xf32>
    %36 = arith.truncf %35 : vector<8x40xf32> to vector<8x40xbf16>
    %c0_23 = arith.constant 0 : index
    %c0_24 = arith.constant 0 : index
    %c32 = arith.constant 32 : index
    %37 = vector.load %arg5[%c0_23, %c0_24, %c32] : memref<1x8x72xbf16, #tpu.memory_space<vmem>>, vector<1x8x40xbf16>
    %38 = vector.shape_cast %37 : vector<1x8x40xbf16> to vector<8x40xbf16>
    %39 = vector.shape_cast %36 : vector<8x40xbf16> to vector<1x8x40xbf16>
    tpu.vector_store %arg5[%c0_23, %c0_24, %c32], %39 {strides = array<i32>} : memref<1x8x72xbf16, #tpu.memory_space<vmem>>, vector<1x8x40xbf16>,
    return
  }
  func.func @transform_0(%arg0: i32) -> (i32, i32, i32) {
    %c0_i32 = arith.constant 0 : i32
    %c0_i32_0 = arith.constant 0 : i32
    %c0_i32_1 = arith.constant 0 : i32
    return %arg0, %c0_i32, %c0_i32_0 : i32, i32, i32
  }
  func.func @transform_1(%arg0: i32) -> (i32, i32) {
    %c0_i32 = arith.constant 0 : i32
    %c0_i32_0 = arith.constant 0 : i32
    %c0_i32_1 = arith.constant 0 : i32
    return %c0_i32, %c0_i32_0 : i32, i32
  }
  func.func @transform_2(%arg0: i32) -> (i32, i32) {
    %c0_i32 = arith.constant 0 : i32
    %c0_i32_0 = arith.constant 0 : i32
    %c0_i32_1 = arith.constant 0 : i32
    return %c0_i32, %c0_i32_0 : i32, i32
  }
  func.func @transform_3(%arg0: i32) -> (i32, i32) {
    %c0_i32 = arith.constant 0 : i32
    %c0_i32_0 = arith.constant 0 : i32
    %c0_i32_1 = arith.constant 0 : i32
    return %c0_i32, %c0_i32_0 : i32, i32
  }
  func.func @transform_4(%arg0: i32) -> (i32, i32, i32) {
    %c0_i32 = arith.constant 0 : i32
    %c0_i32_0 = arith.constant 0 : i32
    %c0_i32_1 = arith.constant 0 : i32
    return %arg0, %c0_i32, %c0_i32_0 : i32, i32, i32
  }
  func.func @transform_5(%arg0: i32) -> (i32, i32, i32) {
    %c0_i32 = arith.constant 0 : i32
    %c0_i32_0 = arith.constant 0 : i32
    %c0_i32_1 = arith.constant 0 : i32
    return %arg0, %c0_i32, %c0_i32_0 : i32, i32, i32
  }
}

module attributes {stable_mosaic.version = 11 : i64} {
  func.func @kernel(%arg0: i32, %arg1: memref<1x32x256xf32, #tpu.memory_space<vmem>>, %arg2: memref<256x72xbf16, #tpu.memory_space<vmem>>, %arg3: memref<32x32xbf16, #tpu.memory_space<vmem>>, %arg4: memref<32x1xf32, #tpu.memory_space<vmem>>, %arg5: memref<1x8x72xbf16, #tpu.memory_space<vmem>>, %arg6: memref<1x32x384xbf16, #tpu.memory_space<vmem>>) attributes {dimension_semantics = [#tpu.dimension_semantics<parallel>], iteration_bounds = array<i64: 2>, scalar_prefetch = 0 : i64, scratch_operands = 0 : i64, tpu.core_type = #tpu.core_type<tc>, window_params = [{transform_indices = @transform_0, window_bounds = array<i64: 1, 32, 256>}, {pipeline_mode = #tpu.pipeline_mode<synchronous>, transform_indices = @transform_1, window_bounds = array<i64: 256, 72>}, {pipeline_mode = #tpu.pipeline_mode<synchronous>, transform_indices = @transform_2, window_bounds = array<i64: 32, 32>}, {pipeline_mode = #tpu.pipeline_mode<synchronous>, transform_indices = @transform_3, window_bounds = array<i64: 32, 1>}, {transform_indices = @transform_4, window_bounds = array<i64: 1, 8, 72>}, {transform_indices = @transform_5, window_bounds = array<i64: 1, 32, 384>}]} {
    %c0 = arith.constant 0 : index
    %c0_0 = arith.constant 0 : index
    %c0_1 = arith.constant 0 : index
    %0 = vector.load %arg1[%c0, %c0_0, %c0_1] : memref<1x32x256xf32, #tpu.memory_space<vmem>>, vector<1x32x256xf32>
    %1 = vector.shape_cast %0 : vector<1x32x256xf32> to vector<32x256xf32>
    %2 = arith.truncf %1 : vector<32x256xf32> to vector<32x256xbf16>
    %cst = arith.constant 0.000000e+00 : bf16
    %3 = vector.broadcast %cst : bf16 to vector<32x384xbf16>
    %c0_2 = arith.constant 0 : index
    %c0_3 = arith.constant 0 : index
    %c0_4 = arith.constant 0 : index
    %4 = vector.load %arg6[%c0_2, %c0_3, %c0_4] : memref<1x32x384xbf16, #tpu.memory_space<vmem>>, vector<1x32x384xbf16>
    %5 = vector.shape_cast %4 : vector<1x32x384xbf16> to vector<32x384xbf16>
    %6 = vector.shape_cast %3 : vector<32x384xbf16> to vector<1x32x384xbf16>
    tpu.vector_store %arg6[%c0_2, %c0_3, %c0_4], %6 {strides = array<i32>} : memref<1x32x384xbf16, #tpu.memory_space<vmem>>, vector<1x32x384xbf16>,
    %c0_5 = arith.constant 0 : index
    %c0_6 = arith.constant 0 : index
    %c17 = arith.constant 17 : index
    %7 = vector.load %arg6[%c0_5, %c0_6, %c17] : memref<1x32x384xbf16, #tpu.memory_space<vmem>>, vector<1x32x256xbf16>
    %8 = vector.shape_cast %7 : vector<1x32x256xbf16> to vector<32x256xbf16>
    %9 = vector.shape_cast %2 : vector<32x256xbf16> to vector<1x32x256xbf16>
    tpu.vector_store %arg6[%c0_5, %c0_6, %c17], %9 {strides = array<i32>} : memref<1x32x384xbf16, #tpu.memory_space<vmem>>, vector<1x32x256xbf16>,
    %c0_7 = arith.constant 0 : index
    %c0_8 = arith.constant 0 : index
    %10 = vector.load %arg2[%c0_7, %c0_8] : memref<256x72xbf16, #tpu.memory_space<vmem>>, vector<256x72xbf16>
    %cst_9 = arith.constant dense<0.000000e+00> : vector<32x72xf32>
    %11 = tpu.matmul %2, %10, %cst_9 {dimension_numbers = #tpu.dot_dimension_numbers<[1], [0], [0], [1], [0, 0, 1, 1], [], []>} : vector<32x256xbf16>, vector<256x72xbf16>, vector<32x72xf32> -> vector<32x72xf32>
    %c0_10 = arith.constant 0 : index
    %c0_11 = arith.constant 0 : index
    %12 = vector.load %arg3[%c0_10, %c0_11] : memref<32x32xbf16, #tpu.memory_space<vmem>>, vector<32x32xbf16>
    %13 = arith.truncf %11 : vector<32x72xf32> to vector<32x72xbf16>
    %cst_12 = arith.constant dense<0.000000e+00> : vector<32x72xf32>
    %14 = tpu.matmul %12, %13, %cst_12 {dimension_numbers = #tpu.dot_dimension_numbers<[1], [0], [0], [1], [0, 0, 1, 1], [], []>} : vector<32x32xbf16>, vector<32x72xbf16>, vector<32x72xf32> -> vector<32x72xf32>
    %c0_13 = arith.constant 0 : index
    %c0_14 = arith.constant 0 : index
    %15 = vector.load %arg4[%c0_13, %c0_14] : memref<32x1xf32, #tpu.memory_space<vmem>>, vector<32x1xf32>
    %16 = vector.broadcast %15 : vector<32x1xf32> to vector<32x72xf32>
    %17 = arith.addf %14, %16 : vector<32x72xf32>
    %cst_15 = arith.constant 0.000000e+00 : f32
    %18 = vector.broadcast %cst_15 : f32 to vector<32x72xf32>
    %19 = arith.maximumf %17, %18 : vector<32x72xf32>
    %20 = vector.extract_strided_slice %19 {offsets = [0, 0], sizes = [8, 8], strides = [1, 1]} : vector<32x72xf32> to vector<8x8xf32>
    %21 = arith.truncf %20 : vector<8x8xf32> to vector<8x8xbf16>
    %c0_16 = arith.constant 0 : index
    %c0_17 = arith.constant 0 : index
    %c0_18 = arith.constant 0 : index
    %22 = vector.load %arg5[%c0_16, %c0_17, %c0_18] : memref<1x8x72xbf16, #tpu.memory_space<vmem>>, vector<1x8x8xbf16>
    %23 = vector.shape_cast %22 : vector<1x8x8xbf16> to vector<8x8xbf16>
    %24 = vector.shape_cast %21 : vector<8x8xbf16> to vector<1x8x8xbf16>
    tpu.vector_store %arg5[%c0_16, %c0_17, %c0_18], %24 {strides = array<i32>} : memref<1x8x72xbf16, #tpu.memory_space<vmem>>, vector<1x8x8xbf16>,
    %25 = vector.extract_strided_slice %19 {offsets = [8, 8], sizes = [8, 8], strides = [1, 1]} : vector<32x72xf32> to vector<8x8xf32>
    %26 = arith.truncf %25 : vector<8x8xf32> to vector<8x8xbf16>
    %c0_19 = arith.constant 0 : index
    %c0_20 = arith.constant 0 : index
    %c8 = arith.constant 8 : index
    %27 = vector.load %arg5[%c0_19, %c0_20, %c8] : memref<1x8x72xbf16, #tpu.memory_space<vmem>>, vector<1x8x8xbf16>
    %28 = vector.shape_cast %27 : vector<1x8x8xbf16> to vector<8x8xbf16>
    %29 = vector.shape_cast %26 : vector<8x8xbf16> to vector<1x8x8xbf16>
    tpu.vector_store %arg5[%c0_19, %c0_20, %c8], %29 {strides = array<i32>} : memref<1x8x72xbf16, #tpu.memory_space<vmem>>, vector<1x8x8xbf16>,
    %30 = vector.extract_strided_slice %19 {offsets = [16, 16], sizes = [8, 16], strides = [1, 1]} : vector<32x72xf32> to vector<8x16xf32>
    %31 = arith.truncf %30 : vector<8x16xf32> to vector<8x16xbf16>
    %c0_21 = arith.constant 0 : index
    %c0_22 = arith.constant 0 : index
    %c16 = arith.constant 16 : index
    %32 = vector.load %arg5[%c0_21, %c0_22, %c16] : memref<1x8x72xbf16, #tpu.memory_space<vmem>>, vector<1x8x16xbf16>
    %33 = vector.shape_cast %32 : vector<1x8x16xbf16> to vector<8x16xbf16>
    %34 = vector.shape_cast %31 : vector<8x16xbf16> to vector<1x8x16xbf16>
    tpu.vector_store %arg5[%c0_21, %c0_22, %c16], %34 {strides = array<i32>} : memref<1x8x72xbf16, #tpu.memory_space<vmem>>, vector<1x8x16xbf16>,
    %35 = vector.extract_strided_slice %19 {offsets = [24, 32], sizes = [8, 40], strides = [1, 1]} : vector<32x72xf32> to vector<8x40xf32>
    %36 = arith.truncf %35 : vector<8x40xf32> to vector<8x40xbf16>
    %c0_23 = arith.constant 0 : index
    %c0_24 = arith.constant 0 : index
    %c32 = arith.constant 32 : index
    %37 = vector.load %arg5[%c0_23, %c0_24, %c32] : memref<1x8x72xbf16, #tpu.memory_space<vmem>>, vector<1x8x40xbf16>
    %38 = vector.shape_cast %37 : vector<1x8x40xbf16> to vector<8x40xbf16>
    %39 = vector.shape_cast %36 : vector<8x40xbf16> to vector<1x8x40xbf16>
    tpu.vector_store %arg5[%c0_23, %c0_24, %c32], %39 {strides = array<i32>} : memref<1x8x72xbf16, #tpu.memory_space<vmem>>, vector<1x8x40xbf16>,
    return
  }
  func.func @transform_0(%arg0: i32) -> (i32, i32, i32) {
    %c0_i32 = arith.constant 0 : i32
    %c0_i32_0 = arith.constant 0 : i32
    %c0_i32_1 = arith.constant 0 : i32
    return %arg0, %c0_i32, %c0_i32_0 : i32, i32, i32
  }
  func.func @transform_1(%arg0: i32) -> (i32, i32) {
    %c0_i32 = arith.constant 0 : i32
    %c0_i32_0 = arith.constant 0 : i32
    %c0_i32_1 = arith.constant 0 : i32
    return %c0_i32, %c0_i32_0 : i32, i32
  }
  func.func @transform_2(%arg0: i32) -> (i32, i32) {
    %c0_i32 = arith.constant 0 : i32
    %c0_i32_0 = arith.constant 0 : i32
    %c0_i32_1 = arith.constant 0 : i32
    return %c0_i32, %c0_i32_0 : i32, i32
  }
  func.func @transform_3(%arg0: i32) -> (i32, i32) {
    %c0_i32 = arith.constant 0 : i32
    %c0_i32_0 = arith.constant 0 : i32
    %c0_i32_1 = arith.constant 0 : i32
    return %c0_i32, %c0_i32_0 : i32, i32
  }
  func.func @transform_4(%arg0: i32) -> (i32, i32, i32) {
    %c0_i32 = arith.constant 0 : i32
    %c0_i32_0 = arith.constant 0 : i32
    %c0_i32_1 = arith.constant 0 : i32
    return %arg0, %c0_i32, %c0_i32_0 : i32, i32, i32
  }
  func.func @transform_5(%arg0: i32) -> (i32, i32, i32) {
    %c0_i32 = arith.constant 0 : i32
    %c0_i32_0 = arith.constant 0 : i32
    %c0_i32_1 = arith.constant 0 : i32
    return %arg0, %c0_i32, %c0_i32_0 : i32, i32, i32
  }
}

</mosaic_0001>

<llo_original>
// kernel: tpu_custom_call.1
$region0: #{tpu_custom_call.1}
  #allocation0 [shape = 'u32[]', space=smem, size = 0x4, offset = 0x4, fixed_abs, tag = 'smem constant byte address 0x4 - core index']
  #allocation1 [shape = 'u32[144,128]{1,0:T(1,128)}', space=vmem, size = 0x12000, scoped, tag = 'internal scratch']
  %s0 = inlined_call_operand.vmem [shape: f32[2,32,256], index: 0, kind: input, shape index: {}]
  %s1 = inlined_call_operand.vmem [shape: bf16[256,72], index: 1, kind: input, shape index: {}]
  %s2 = inlined_call_operand.vmem [shape: bf16[32,32], index: 2, kind: input, shape index: {}]
  %s3 = inlined_call_operand.vmem [shape: f32[32,1], index: 3, kind: input, shape index: {}]
  %s4 = inlined_call_operand.hbm [shape: bf16[2,8,72], index: 4, kind: output, shape index: {0}]
  %s5 = inlined_call_operand.hbm [shape: bf16[2,32,384], index: 5, kind: output, shape index: {1}]
  %6 = xla_tuple %s4, %s5
  %s7 = sld [smem:[#allocation0]]
  $region57: #{tpu_custom_call.1} parent=0
    _
  %s9 = ssub.s32 1, %s7
  %s10 = scalar_select 0, %s9, %s7
  $region1: #{tpu_custom_call.1} parent=0
    #allocation2 [shape = 'u8[4096]{0}', space=vmem, size = 0x1000, scoped, tag = 'output window, operand 0']
    #allocation3 [shape = 's32[2]{0}', space=sflag, size = 0x8, scoped, tag = 'scoped memory for tpu_custom_call.1']
    #allocation4 [shape = 'u8[49152]{0}', space=vmem, size = 0xc000, scoped, tag = 'output window, operand 1']
    #allocation5 [shape = 's32[2]{0}', space=sflag, size = 0x8, scoped, tag = 'scoped memory for tpu_custom_call.1']
    %11 = vsyncpa [#allocation3], 0
    %s12 = scalar_lea.sflag [#allocation3], 1
    %13 = vsyncpa %s12, 0
    %14 = vsyncpa [#allocation5], 0
    %s15 = scalar_lea.sflag [#allocation5], 1
    %16 = vsyncpa %s15, 0
    loop: start=0, step=1, limit=4
    $region2: #{tpu_custom_call.1} parent=1 // loop_pre_header
      _
    $region3: #{tpu_custom_call.1} parent=1 // loop_header
      %s18 = sphi 0, %s22
      %p19 = scmp.ge.s32.totalorder %s18, 4
      %s28 = sphi 0, %s30
      %s31 = sphi 0, %s28
      %s32 = sphi 0, %s31
      %s48 = sphi 0, %s32
      %s52 = sphi 0, %s52
      %s54 = sphi 0, %s52
      %s55 = sphi 0, %s54
      %s69 = sphi 0, %s55
      %s73 = sphi 0, %s73
      %s75 = sphi 0, %s73
      %s76 = sphi 0, %s75
      %s90 = sphi 0, %s76
      %s94 = sphi 0, %s94
      %s96 = sphi 0, %s94
      %s97 = sphi 0, %s96
      %s111 = sphi 0, %s97
      %s117 = sphi 0, %s119
      %s120 = sphi 0, %s117
      %s121 = sphi 0, %s120
      %s137 = sphi 0, %s121
      %s143 = sphi 0, %s145
      %s146 = sphi 0, %s143
      %s147 = sphi 0, %s146
      %s163 = sphi 0, %s147
    $region4: #{tpu_custom_call.1} parent=1 // loop_header_branch
      %21 = sbr.rel (%p19) target = $region8
    $region5: #{tpu_custom_call.1} parent=1 // loop_body
      %s23 = ssub.s32 %s18, 1
      %s24 = ssub.s32 %s18, 2
      %s25 = sadd.s32 %s18, 1
      %s26 = ssub.s32 %s18, %s25
      %p27 = scmp.eq.s32.totalorder %s26, 0
      %s29 = sadd.s32 %s28, 1
      %s30 = scalar_select %p27, %s28, %s29
      %p33 = pneg %p27
      %p34 = scmp.eq.s32.totalorder %s18, 1
      %p35 = por %p33, %p34
      %p36 = scmp.ne.s32.totalorder %s28, %s31
      %p37 = scmp.eq.s32.totalorder %s18, 0
      %p38 = por %p36, %p37
      %p39 = scmp.ne.s32.totalorder %s28, %s31
      %p40 = scmp.eq.s32.totalorder %s23, 1
      %p41 = por %p39, %p40
      %p42 = scmp.ne.s32.totalorder %s31, %s32
      %p43 = scmp.eq.s32.totalorder %s23, 0
      %p44 = por %p42, %p43
      %p45 = scmp.ne.s32.totalorder %s31, %s32
      %p46 = scmp.eq.s32.totalorder %s24, 1
      %p47 = por %p45, %p46
      %p49 = scmp.ne.s32.totalorder %s32, %s48
      %p50 = scmp.eq.s32.totalorder %s24, 0
      %p51 = por %p49, %p50
      %s53 = sadd.s32 %s52, 1
      %p56 = scmp.eq.s32.totalorder %s18, 1
      %p57 = scmp.ne.s32.totalorder %s52, %s54
      %p58 = scmp.eq.s32.totalorder %s18, 0
      %p59 = por %p57, %p58
      %p60 = scmp.ne.s32.totalorder %s52, %s54
      %p61 = scmp.eq.s32.totalorder %s23, 1
      %p62 = por %p60, %p61
      %p63 = scmp.ne.s32.totalorder %s54, %s55
      %p64 = scmp.eq.s32.totalorder %s23, 0
      %p65 = por %p63, %p64
      %p66 = scmp.ne.s32.totalorder %s54, %s55
      %p67 = scmp.eq.s32.totalorder %s24, 1
      %p68 = por %p66, %p67
      %p70 = scmp.ne.s32.totalorder %s55, %s69
      %p71 = scmp.eq.s32.totalorder %s24, 0
      %p72 = por %p70, %p71
      %s74 = sadd.s32 %s73, 1
      %p77 = scmp.eq.s32.totalorder %s18, 1
      %p78 = scmp.ne.s32.totalorder %s73, %s75
      %p79 = scmp.eq.s32.totalorder %s18, 0
      %p80 = por %p78, %p79
      %p81 = scmp.ne.s32.totalorder %s73, %s75
      %p82 = scmp.eq.s32.totalorder %s23, 1
      %p83 = por %p81, %p82
      %p84 = scmp.ne.s32.totalorder %s75, %s76
      %p85 = scmp.eq.s32.totalorder %s23, 0
      %p86 = por %p84, %p85
      %p87 = scmp.ne.s32.totalorder %s75, %s76
      %p88 = scmp.eq.s32.totalorder %s24, 1
      %p89 = por %p87, %p88
      %p91 = scmp.ne.s32.totalorder %s76, %s90
      %p92 = scmp.eq.s32.totalorder %s24, 0
      %p93 = por %p91, %p92
      %s95 = sadd.s32 %s94, 1
      %p98 = scmp.eq.s32.totalorder %s18, 1
      %p99 = scmp.ne.s32.totalorder %s94, %s96
      %p100 = scmp.eq.s32.totalorder %s18, 0
      %p101 = por %p99, %p100
      %p102 = scmp.ne.s32.totalorder %s94, %s96
      %p103 = scmp.eq.s32.totalorder %s23, 1
      %p104 = por %p102, %p103
      %p105 = scmp.ne.s32.totalorder %s96, %s97
      %p106 = scmp.eq.s32.totalorder %s23, 0
      %p107 = por %p105, %p106
      %p108 = scmp.ne.s32.totalorder %s96, %s97
      %p109 = scmp.eq.s32.totalorder %s24, 1
      %p110 = por %p108, %p109
      %p112 = scmp.ne.s32.totalorder %s97, %s111
      %p113 = scmp.eq.s32.totalorder %s24, 0
      %p114 = por %p112, %p113
      %s115 = ssub.s32 %s18, %s25
      %p116 = scmp.eq.s32.totalorder %s115, 0
      %s118 = sadd.s32 %s117, 1
      %s119 = scalar_select %p116, %s117, %s118
      %p122 = pneg %p116
      %p123 = scmp.eq.s32.totalorder %s18, 1
      %p124 = por %p122, %p123
      %p125 = scmp.ne.s32.totalorder %s117, %s120
      %p126 = scmp.eq.s32.totalorder %s18, 0
      %p127 = por %p125, %p126
      %p128 = scmp.ne.s32.totalorder %s117, %s120
      %p129 = scmp.eq.s32.totalorder %s23, 1
      %p130 = por %p128, %p129
      %p131 = scmp.ne.s32.totalorder %s120, %s121
      %p132 = scmp.eq.s32.totalorder %s23, 0
      %p133 = por %p131, %p132
      %p134 = scmp.ne.s32.totalorder %s120, %s121
      %p135 = scmp.eq.s32.totalorder %s24, 1
      %p136 = por %p134, %p135
      %p138 = scmp.ne.s32.totalorder %s121, %s137
      %p139 = scmp.eq.s32.totalorder %s24, 0
      %p140 = por %p138, %p139
      %s141 = ssub.s32 %s18, %s25
      %p142 = scmp.eq.s32.totalorder %s141, 0
      %s144 = sadd.s32 %s143, 1
      %s145 = scalar_select %p142, %s143, %s144
      %p148 = pneg %p142
      %p149 = scmp.eq.s32.totalorder %s18, 1
      %p150 = por %p148, %p149
      %p151 = scmp.ne.s32.totalorder %s143, %s146
      %p152 = scmp.eq.s32.totalorder %s18, 0
      %p153 = por %p151, %p152
      %p154 = scmp.ne.s32.totalorder %s143, %s146
      %p155 = scmp.eq.s32.totalorder %s23, 1
      %p156 = por %p154, %p155
      %p157 = scmp.ne.s32.totalorder %s146, %s147
      %p158 = scmp.eq.s32.totalorder %s23, 0
      %p159 = por %p157, %p158
      %p160 = scmp.ne.s32.totalorder %s146, %s147
      %p161 = scmp.eq.s32.totalorder %s24, 1
      %p162 = por %p160, %p161
      %p164 = scmp.ne.s32.totalorder %s147, %s163
      %p165 = scmp.eq.s32.totalorder %s24, 0
      %p166 = por %p164, %p165
      %p167 = scmp.le.s32.totalorder 1, %s18
      %p168 = scmp.lt.s32.totalorder %s18, 3
      %p169 = pnand %p167, %p168
      %p170 = pneg %p169
      // Predicated region
      $region9: #{tpu_custom_call.1} parent=5 // pred_check
        _
      $region10: #{tpu_custom_call.1} parent=5 // pred_check_branch
        %172 = sbr.rel (%p169) target = $region12
      $region11: #{tpu_custom_call.1} parent=5 // pred_region
        %s173 = ssub.s32 %s18, 1
        // Predicated region
        $region13: #{tpu_custom_call.1} parent=11 // pred_check
          %p174 = pneg %p65
        $region14: #{tpu_custom_call.1} parent=11 // pred_check_branch
          %176 = sbr.rel (%p174) target = $region16
        $region15: #{tpu_custom_call.1} parent=11 // pred_region
          _
        $region16: #{tpu_custom_call.1} parent=11 // pred_fallthru
          _
        // Predicated region
        $region17: #{tpu_custom_call.1} parent=11 // pred_check
          %p177 = pneg %p86
        $region18: #{tpu_custom_call.1} parent=11 // pred_check_branch
          %179 = sbr.rel (%p177) target = $region20
        $region19: #{tpu_custom_call.1} parent=11 // pred_region
          _
        $region20: #{tpu_custom_call.1} parent=11 // pred_fallthru
          _
        // Predicated region
        $region21: #{tpu_custom_call.1} parent=11 // pred_check
          %p180 = pneg %p107
        $region22: #{tpu_custom_call.1} parent=11 // pred_check_branch
          %182 = sbr.rel (%p180) target = $region24
        $region23: #{tpu_custom_call.1} parent=11 // pred_region
          _
        $region24: #{tpu_custom_call.1} parent=11 // pred_fallthru
          _
      $region12: #{tpu_custom_call.1} parent=5 // pred_fallthru
        _
      %p183 = scmp.lt.s32.totalorder %s18, 2
      // Predicated region
      $region25: #{tpu_custom_call.1} parent=5 // pred_check
        %p184 = pneg %p183
      $region26: #{tpu_custom_call.1} parent=5 // pred_check_branch
        %186 = sbr.rel (%p184) target = $region28
      $region27: #{tpu_custom_call.1} parent=5 // pred_region
        // Predicated region
        $region29: #{tpu_custom_call.1} parent=27 // pred_check
          %p187 = pneg %p38
        $region30: #{tpu_custom_call.1} parent=27 // pred_check_branch
          %189 = sbr.rel (%p187) target = $region32
        $region31: #{tpu_custom_call.1} parent=27 // pred_region
          %p190 = scmp.lt.s32.totalorder %s18, 1
          %s191 = scalar_select %p190, %s18, 1
          %s192 = smul.addr %s191, 8
          %s193 = smul.addr %s192, 8
          %s194 = scalar_lea.vmem %s0, %s193
        $region32: #{tpu_custom_call.1} parent=27 // pred_fallthru
          _
      $region28: #{tpu_custom_call.1} parent=5 // pred_fallthru
        _
      %p195 = scmp.le.s32.totalorder 1, %s18
      %p196 = scmp.lt.s32.totalorder %s18, 3
      %p197 = pnand %p195, %p196
      %p198 = pneg %p197
      // Predicated region
      $region33: #{tpu_custom_call.1} parent=5 // pred_check
        _
      $region34: #{tpu_custom_call.1} parent=5 // pred_check_branch
        %200 = sbr.rel (%p197) target = $region36
      $region35: #{tpu_custom_call.1} parent=5 // pred_region
        %s201 = ssub.s32 %s18, 1
        %p202 = scmp.lt.s32.totalorder %s23, 1
        %s203 = scalar_select %p202, %s23, 1
        %s204 = smul.addr %s203, 8
        %s205 = smul.addr %s204, 8
        %s206 = scalar_lea.vmem %s0, %s205
        %p207 = pneg %p44
        %p208 = pneg %p41
        %p209 = pneg %p65
        %p210 = pneg %p62
        %p211 = pneg %p86
        %p212 = pneg %p83
        %p213 = pneg %p107
        %p214 = pneg %p104
        %p215 = pneg %p133
        %p216 = pneg %p130
        %s217 = sand.u32 %s120, 1
        %s218 = scalar_lea.sflag [#allocation3], %s217
        %s219 = sand.u32 %s120, 1
        %s220 = smul.addr %s219, 4
        %s221 = scalar_lea.vmem [#allocation2], %s220
        %p222 = pneg %p159
        %p223 = pneg %p156
        %s224 = sand.u32 %s146, 1
        %s225 = scalar_lea.sflag [#allocation5], %s224
        %s226 = sand.u32 %s146, 1
        %s227 = smul.addr %s226, 48
        %s228 = scalar_lea.vmem [#allocation4], %s227
        %p229 = scmp.lt.s32.totalorder %s23, 1
        %s230 = scalar_select %p229, %s23, 1
        %s231 = smul.addr %s230, 8
        %s232 = smul.addr %s231, 8
        %s233 = scalar_lea.vmem %s0, %s232
        %v235 = vld [vmem:[%s233] sm:$0xff]
        %v236 = vld [vmem:[%s233 + $0x8] sm:$0xff]
        %v237 = vld [vmem:[%s233 + $0x10] sm:$0xff]
        %v238 = vld [vmem:[%s233 + $0x18] sm:$0xff]
        %v239 = vld [vmem:[%s233 + $0x20] sm:$0xff]
        %v240 = vld [vmem:[%s233 + $0x28] sm:$0xff]
        %v241 = vld [vmem:[%s233 + $0x30] sm:$0xff]
        %v242 = vld [vmem:[%s233 + $0x38] sm:$0xff]
        %v243 = vpack.c.bf16 %v237, %v235
        %v244 = vpack.c.bf16 %v238, %v236
        %v245 = vpack.c.bf16 %v241, %v239
        %v246 = vpack.c.bf16 %v242, %v240
        %247 = vst [vmem:[%s228] sm:$0xff] 0
        %248 = vst [vmem:[%s228 + $0x8] sm:$0xf] 0
        %249 = vst [vmem:[%s228 + $0xc] sm:$0xff] 0
        %250 = vst [vmem:[%s228 + $0x14] sm:$0xf] 0
        %251 = vst [vmem:[%s228 + $0x18] sm:$0xff] 0
        %252 = vst [vmem:[%s228 + $0x20] sm:$0xf] 0
        %253 = vst [vmem:[%s228 + $0x24] sm:$0xff] 0
        %254 = vst [vmem:[%s228 + $0x2c] sm:$0xf] 0
        %v259 = vunpack.c.l.b16 %v243
        %v260 = vunpack.c.l.b16 %v244
        %v261 = vunpack.c.h.b16 %v243
        %v262 = vunpack.c.h.b16 %v244
        %v263 = vunpack.c.l.b16 %v245
        %v264 = vunpack.c.l.b16 %v246
        %v265 = vunpack.c.h.b16 %v245
        %v266 = vunpack.c.h.b16 %v246
        %v267 = vpack.c.b16 %v260, %v259
        %v268 = vpack.c.b16 %v262, %v261
        %v269 = vpack.c.b16 %v264, %v263
        %v270 = vpack.c.b16 %v266, %v265
        %271 = vrot.lane.b32.xlu0 %v267, 17
        %v272 = vpop.permute.xlu0 %271
        %273 = vrot.lane.b32.xlu0 %v268, 17
        %v274 = vpop.permute.xlu0 %273
        %275 = vrot.lane.b32.xlu0 %v269, 17
        %v276 = vpop.permute.xlu0 %275
        %277 = vrot.lane.b32.xlu0 %v270, 17
        %v278 = vpop.permute.xlu0 %277
        %v279 = vrot.slane %v272, 4
        %v280 = vrot.slane %v274, 4
        %v281 = vrot.slane %v276, 4
        %v282 = vrot.slane %v278, 4
        %vm283 = vcmask 138240
        %v284 = vsel %vm283, %v279, %v272
        %v285 = vsel %vm283, %v280, %v274
        %v286 = vsel %vm283, %v281, %v276
        %v287 = vsel %vm283, %v282, %v278
        %vm296 = vcmask 1043592
        %vm297 = vcmask 1047556
        %vm298 = vmor %vm297, %vm296
        %299 = vst.msk [vmem:[%s228] sm:$0xff] %vm298, %v284
        %vm300 = vcmask 134144
        %301 = vst.msk [vmem:[%s228 + $0x8] sm:$0xf] %vm300, %v279
        %302 = vst.msk [vmem:[%s228 + $0xc] sm:$0xff] %vm298, %v285
        %303 = vst.msk [vmem:[%s228 + $0x14] sm:$0xf] %vm300, %v280
        %304 = vst.msk [vmem:[%s228 + $0x18] sm:$0xff] %vm298, %v286
        %305 = vst.msk [vmem:[%s228 + $0x20] sm:$0xf] %vm300, %v281
        %306 = vst.msk [vmem:[%s228 + $0x24] sm:$0xff] %vm298, %v287
        %307 = vst.msk [vmem:[%s228 + $0x2c] sm:$0xf] %vm300, %v282
        %v308 = vld [vmem:[%s1] sm:$0xf]
        %v309 = vld [vmem:[%s1 + $0x4] sm:$0xf]
        %v310 = vld [vmem:[%s1 + $0x8] sm:$0xf]
        %v311 = vld [vmem:[%s1 + $0xc] sm:$0xf]
        %v312 = vld [vmem:[%s1 + $0x10] sm:$0xf]
        %v313 = vld [vmem:[%s1 + $0x14] sm:$0xf]
        %v314 = vld [vmem:[%s1 + $0x18] sm:$0xf]
        %v315 = vld [vmem:[%s1 + $0x1c] sm:$0xf]
        %v316 = vld [vmem:[%s1 + $0x20] sm:$0xf]
        %v317 = vld [vmem:[%s1 + $0x24] sm:$0xf]
        %v318 = vld [vmem:[%s1 + $0x28] sm:$0xf]
        %v319 = vld [vmem:[%s1 + $0x2c] sm:$0xf]
        %v320 = vld [vmem:[%s1 + $0x30] sm:$0xf]
        %v321 = vld [vmem:[%s1 + $0x34] sm:$0xf]
        %v322 = vld [vmem:[%s1 + $0x38] sm:$0xf]
        %v323 = vld [vmem:[%s1 + $0x3c] sm:$0xf]
        %v324 = vld [vmem:[%s1 + $0x40] sm:$0xf]
        %v325 = vld [vmem:[%s1 + $0x44] sm:$0xf]
        %v326 = vld [vmem:[%s1 + $0x48] sm:$0xf]
        %v327 = vld [vmem:[%s1 + $0x4c] sm:$0xf]
        %v328 = vld [vmem:[%s1 + $0x50] sm:$0xf]
        %v329 = vld [vmem:[%s1 + $0x54] sm:$0xf]
        %v330 = vld [vmem:[%s1 + $0x58] sm:$0xf]
        %v331 = vld [vmem:[%s1 + $0x5c] sm:$0xf]
        %v332 = vld [vmem:[%s1 + $0x60] sm:$0xf]
        %v333 = vld [vmem:[%s1 + $0x64] sm:$0xf]
        %v334 = vld [vmem:[%s1 + $0x68] sm:$0xf]
        %v335 = vld [vmem:[%s1 + $0x6c] sm:$0xf]
        %v336 = vld [vmem:[%s1 + $0x70] sm:$0xf]
        %v337 = vld [vmem:[%s1 + $0x74] sm:$0xf]
        %v338 = vld [vmem:[%s1 + $0x78] sm:$0xf]
        %v339 = vld [vmem:[%s1 + $0x7c] sm:$0xf]
        %v372 = vunpack.c.l.b16 %v308
        %v373 = vunpack.c.l.b16 %v309
        %v374 = vunpack.c.l.b16 %v310
        %v375 = vunpack.c.l.b16 %v311
        %v376 = vunpack.c.l.b16 %v312
        %v377 = vunpack.c.l.b16 %v313
        %v378 = vunpack.c.l.b16 %v314
        %v379 = vunpack.c.l.b16 %v315
        %v380 = vunpack.c.l.b16 %v316
        %v381 = vunpack.c.l.b16 %v317
        %v382 = vunpack.c.l.b16 %v318
        %v383 = vunpack.c.l.b16 %v319
        %v384 = vunpack.c.l.b16 %v320
        %v385 = vunpack.c.l.b16 %v321
        %v386 = vunpack.c.l.b16 %v322
        %v387 = vunpack.c.l.b16 %v323
        %v388 = vunpack.c.l.b16 %v324
        %v389 = vunpack.c.l.b16 %v325
        %v390 = vunpack.c.l.b16 %v326
        %v391 = vunpack.c.l.b16 %v327
        %v392 = vunpack.c.l.b16 %v328
        %v393 = vunpack.c.l.b16 %v329
        %v394 = vunpack.c.l.b16 %v330
        %v395 = vunpack.c.l.b16 %v331
        %v396 = vunpack.c.l.b16 %v332
        %v397 = vunpack.c.l.b16 %v333
        %v398 = vunpack.c.l.b16 %v334
        %v399 = vunpack.c.l.b16 %v335
        %v400 = vunpack.c.l.b16 %v336
        %v401 = vunpack.c.l.b16 %v337
        %v402 = vunpack.c.l.b16 %v338
        %v403 = vunpack.c.l.b16 %v339
        %v404 = vpack.c.b16 %v373, %v372
        %v405 = vpack.c.b16 %v375, %v374
        %v406 = vpack.c.b16 %v377, %v376
        %v407 = vpack.c.b16 %v379, %v378
        %v408 = vpack.c.b16 %v381, %v380
        %v409 = vpack.c.b16 %v383, %v382
        %v410 = vpack.c.b16 %v385, %v384
        %v411 = vpack.c.b16 %v387, %v386
        %v412 = vpack.c.b16 %v389, %v388
        %v413 = vpack.c.b16 %v391, %v390
        %v414 = vpack.c.b16 %v393, %v392
        %v415 = vpack.c.b16 %v395, %v394
        %v416 = vpack.c.b16 %v397, %v396
        %v417 = vpack.c.b16 %v399, %v398
        %v418 = vpack.c.b16 %v401, %v400
        %v419 = vpack.c.b16 %v403, %v402
        %436 = vmatprep.subr.bf16.mxu0 0
        %437 = vmatpush1.bf16.msra.mxu0 %v411
        %438 = vmatprep.subr.bf16.mxu0 0
        %439 = vmatpush1.bf16.msra.mxu0 %v410
        %440 = vmatprep.subr.bf16.mxu0 0
        %441 = vmatpush1.bf16.msra.mxu0 %v409
        %442 = vmatprep.subr.bf16.mxu0 0
        %443 = vmatpush1.bf16.msra.mxu0 %v408
        %444 = vmatprep.subr.bf16.mxu0 0
        %445 = vmatpush1.bf16.msra.mxu0 %v407
        %446 = vmatprep.subr.bf16.mxu0 0
        %447 = vmatpush1.bf16.msra.mxu0 %v406
        %448 = vmatprep.subr.bf16.mxu0 0
        %449 = vmatpush1.bf16.msra.mxu0 %v405
        %450 = vmatprep.subr.bf16.mxu0 0
        %451 = vmatpush1.bf16.msra.mxu0 %v404
        %452 = vmatprep.subr.bf16.mxu0 0
        %453 = vmatpush2.bf16.msra.mxu0 %v419
        %454 = vmatprep.subr.bf16.mxu0 0
        %455 = vmatpush2.bf16.msra.mxu0 %v418
        %456 = vmatprep.subr.bf16.mxu0 0
        %457 = vmatpush2.bf16.msra.mxu0 %v417
        %458 = vmatprep.subr.bf16.mxu0 0
        %459 = vmatpush2.bf16.msra.mxu0 %v416
        %460 = vmatprep.subr.bf16.mxu0 0
        %461 = vmatpush2.bf16.msra.mxu0 %v415
        %462 = vmatprep.subr.bf16.mxu0 0
        %463 = vmatpush2.bf16.msra.mxu0 %v414
        %464 = vmatprep.subr.bf16.mxu0 0
        %465 = vmatpush2.bf16.msra.mxu0 %v413
        %466 = vmatprep.subr.bf16.mxu0 0
        %467 = vmatpush2.bf16.msra.mxu0 %v412
        %468 = vmatprep.mubr.bf16.mxu0 %v244
        %469 = vmatmul.mubr.bf16.gmra.mxu0 %v243
        %v470 = vpop.f32.mrf.mxu0
        %v471 = vadd.f32 0.0, %v470
        %v472 = vpop.f32.mrf.mxu0
        %v473 = vpop.f32.mrf.mxu0
        %v474 = vadd.f32 0.0, %v473
        %v475 = vpop.f32.mrf.mxu0
        %476 = vmatprep.mubr.bf16.mxu0 %v246
        %477 = vmatmul.mubr.bf16.gmra.mxu0 %v245
        %v478 = vpop.f32.mrf.mxu0
        %v479 = vadd.f32 0.0, %v478
        %v480 = vpop.f32.mrf.mxu0
        %v481 = vpop.f32.mrf.mxu0
        %v482 = vadd.f32 0.0, %v481
        %v483 = vpop.f32.mrf.mxu0
        %484 = vdwg.mxu0
        %v485 = vld [vmem:[%s2] sm:$0xf]
        %v486 = vld [vmem:[%s2 + $0x4] sm:$0xf]
        %v487 = vld [vmem:[%s2 + $0x8] sm:$0xf]
        %v488 = vld [vmem:[%s2 + $0xc] sm:$0xf]
        %v489 = vpack.c.bf16 %v474, %v471
        %v490 = vpack.c.bf16 %v482, %v479
        %v491 = vld [vmem:[%s3] sm:$0xff]
        %v492 = vld [vmem:[%s3 + $0x8] sm:$0xff]
        %v493 = vld [vmem:[%s3 + $0x10] sm:$0xff]
        %v494 = vld [vmem:[%s3 + $0x18] sm:$0xff]
        %496 = vset.pattern.permute.xlu0 0
        %497 = vperm.xlu0 %496, %v491
        %v498 = vpop.permute.xlu0 %497
        %501 = vset.pattern.permute.xlu0 0
        %502 = vperm.xlu0 %501, %v492
        %v503 = vpop.permute.xlu0 %502
        %506 = vset.pattern.permute.xlu0 0
        %507 = vperm.xlu0 %506, %v493
        %v508 = vpop.permute.xlu0 %507
        %511 = vset.pattern.permute.xlu0 0
        %512 = vperm.xlu0 %511, %v494
        %v513 = vpop.permute.xlu0 %512
        %v519 = vunpack.c.l.b16 %v485
        %v520 = vunpack.c.l.b16 %v486
        %v521 = vunpack.c.l.b16 %v487
        %v522 = vunpack.c.l.b16 %v488
        %v523 = vpack.c.b16 %v520, %v519
        %v524 = vpack.c.b16 %v522, %v521
        %vm525 = vcmask 261120
        %v527 = vsel %vm525, %v523, 0
        %v530 = vsel %vm525, %v524, 0
        %532 = vmatprep.subr.bf16.mxu0 0
        %533 = vmatpush1.bf16.msra.mxu0 0
        %534 = vmatprep.subr.bf16.mxu0 0
        %535 = vmatpush1.bf16.msra.mxu0 0
        %536 = vmatprep.subr.bf16.mxu0 0
        %537 = vmatpush1.bf16.msra.mxu0 0
        %538 = vmatprep.subr.bf16.mxu0 0
        %539 = vmatpush1.bf16.msra.mxu0 0
        %540 = vmatprep.subr.bf16.mxu0 0
        %541 = vmatpush1.bf16.msra.mxu0 0
        %542 = vmatprep.subr.bf16.mxu0 0
        %543 = vmatpush1.bf16.msra.mxu0 0
        %544 = vmatprep.subr.bf16.mxu0 0
        %545 = vmatpush1.bf16.msra.mxu0 %v490
        %546 = vmatprep.subr.bf16.mxu0 0
        %547 = vmatpush1.bf16.msra.mxu0 %v489
        %548 = vmatprep.subr.bf16.mxu0 0
        %549 = vmatpush2.bf16.msra.mxu0 0
        %550 = vmatprep.subr.bf16.mxu0 0
        %551 = vmatpush2.bf16.msra.mxu0 0
        %552 = vmatprep.subr.bf16.mxu0 0
        %553 = vmatpush2.bf16.msra.mxu0 0
        %554 = vmatprep.subr.bf16.mxu0 0
        %555 = vmatpush2.bf16.msra.mxu0 0
        %556 = vmatprep.subr.bf16.mxu0 0
        %557 = vmatpush2.bf16.msra.mxu0 0
        %558 = vmatprep.subr.bf16.mxu0 0
        %559 = vmatpush2.bf16.msra.mxu0 0
        %560 = vmatprep.subr.bf16.mxu0 0
        %561 = vmatpush2.bf16.msra.mxu0 0
        %562 = vmatprep.subr.bf16.mxu0 0
        %563 = vmatpush2.bf16.msra.mxu0 0
        %564 = vmatprep.mubr.bf16.mxu0 0
        %565 = vmatmul.mubr.bf16.gmra.mxu0 %v527
        %v566 = vpop.f32.mrf.mxu0
        %v567 = vadd.f32 %v498, %v566
        %v568 = vpop.f32.mrf.mxu0
        %v569 = vpop.f32.mrf.mxu0
        %v570 = vadd.f32 %v503, %v569
        %v571 = vpop.f32.mrf.mxu0
        %572 = vmatprep.mubr.bf16.mxu0 0
        %573 = vmatmul.mubr.bf16.gmra.mxu0 %v530
        %v574 = vpop.f32.mrf.mxu0
        %v575 = vadd.f32 %v508, %v574
        %v576 = vpop.f32.mrf.mxu0
        %v577 = vpop.f32.mrf.mxu0
        %v578 = vadd.f32 %v513, %v577
        %v579 = vpop.f32.mrf.mxu0
        %580 = vdwg.mxu0
        %v581 = vmax.f32 %v567, 0.0
        %v582 = vmax.f32 %v570, 0.0
        %v583 = vmax.f32 %v575, 0.0
        %v584 = vmax.f32 %v578, 0.0
        %v585 = vpack.c.bf16 %v581, %v581
        %vm586 = vcmask 60416
        %587 = vst.msk [vmem:[%s221] sm:$0xf] %vm586, %v585
        %v588 = vpack.c.bf16 %v582, %v582
        %vm589 = vcmask 126016
        %590 = vst.msk [vmem:[%s221] sm:$0xf] %vm589, %v588
        %v591 = vpack.c.bf16 %v583, %v583
        %vm592 = vcmask 257152
        %593 = vst.msk [vmem:[%s221] sm:$0xf] %vm592, %v591
        %v594 = vpack.c.bf16 %v584, %v584
        %vm595 = vcmask 584960
        %596 = vst.msk [vmem:[%s221] sm:$0xf] %vm595, %v594
        %s597 = sand.u32 %s120, 1
        %s598 = scalar_lea.sflag [#allocation3], %s597
        %s599 = sand.u32 %s120, 1
        %s600 = smul.addr %s599, 4
        %s601 = scalar_lea.vmem [#allocation2], %s600
        %s602 = sand.u32 %s146, 1
        %s603 = scalar_lea.sflag [#allocation5], %s602
        %s604 = sand.u32 %s146, 1
        %s605 = smul.addr %s604, 48
        %s606 = scalar_lea.vmem [#allocation4], %s605
        // Predicated region
        $region37: #{tpu_custom_call.1} parent=35 // pred_check
          %p607 = pneg %p130
        $region38: #{tpu_custom_call.1} parent=35 // pred_check_branch
          %609 = sbr.rel (%p607) target = $region40
        $region39: #{tpu_custom_call.1} parent=35 // pred_region
          %s611 = ssub.s32 64, 64
          %612 = vsyncadd %s598, %s611
          %s613 = smul.addr %s23, 64
          %s614 = scalar_lea.hbm %s4, %s613
          %s616 = sshll.u32 %s601, 4
          %s617 = int_to_ptr.vmem [resolvable:$true] %s616
          %619 = dma.vmem_to_hbm [thread:$0]  %s617, 64, %s614, %s598
        $region40: #{tpu_custom_call.1} parent=35 // pred_fallthru
          _
        // Predicated region
        $region41: #{tpu_custom_call.1} parent=35 // pred_check
          %p620 = pneg %p156
        $region42: #{tpu_custom_call.1} parent=35 // pred_check_branch
          %622 = sbr.rel (%p620) target = $region44
        $region43: #{tpu_custom_call.1} parent=35 // pred_region
          %s624 = ssub.s32 768, 768
          %625 = vsyncadd %s603, %s624
          %s626 = smul.addr %s23, 12
          %s627 = smul.addr %s626, 64
          %s628 = scalar_lea.hbm %s5, %s627
          %s629 = sshll.u32 %s606, 4
          %s630 = int_to_ptr.vmem [resolvable:$true] %s629
          %635 = dma.vmem_to_hbm [thread:$0]  %s630, 768, %s628, %s603, 192, 192, 12
        $region44: #{tpu_custom_call.1} parent=35 // pred_fallthru
          _
      $region36: #{tpu_custom_call.1} parent=5 // pred_fallthru
        _
      %p636 = scmp.le.s32.totalorder 2, %s18
      // Predicated region
      $region45: #{tpu_custom_call.1} parent=5 // pred_check
        %p637 = pneg %p636
      $region46: #{tpu_custom_call.1} parent=5 // pred_check_branch
        %639 = sbr.rel (%p637) target = $region48
      $region47: #{tpu_custom_call.1} parent=5 // pred_region
        %s640 = ssub.s32 %s18, 2
        // Predicated region
        $region49: #{tpu_custom_call.1} parent=47 // pred_check
          %p641 = pneg %p136
        $region50: #{tpu_custom_call.1} parent=47 // pred_check_branch
          %643 = sbr.rel (%p641) target = $region52
        $region51: #{tpu_custom_call.1} parent=47 // pred_region
          %s644 = sand.u32 %s121, 1
          %s645 = scalar_lea.sflag [#allocation3], %s644
          %s646 = sand.u32 %s121, 1
          %s647 = smul.addr %s646, 4
          %s648 = scalar_lea.vmem [#allocation2], %s647
          %649 = dma.done %s645, 64
        $region52: #{tpu_custom_call.1} parent=47 // pred_fallthru
          _
        // Predicated region
        $region53: #{tpu_custom_call.1} parent=47 // pred_check
          %p650 = pneg %p162
        $region54: #{tpu_custom_call.1} parent=47 // pred_check_branch
          %652 = sbr.rel (%p650) target = $region56
        $region55: #{tpu_custom_call.1} parent=47 // pred_region
          %s653 = sand.u32 %s147, 1
          %s654 = scalar_lea.sflag [#allocation5], %s653
          %s655 = sand.u32 %s147, 1
          %s656 = smul.addr %s655, 48
          %s657 = scalar_lea.vmem [#allocation4], %s656
          %658 = dma.done %s654, 768
        $region56: #{tpu_custom_call.1} parent=47 // pred_fallthru
          _
      $region48: #{tpu_custom_call.1} parent=5 // pred_fallthru
        _
    $region6: #{tpu_custom_call.1} parent=1 // loop_footer
      %s22 = sadd.s32 1, %s18
    $region7: #{tpu_custom_call.1} parent=1 // loop_footer_branch
      %17 = sbr.rel target = $region3
    $region8: #{tpu_custom_call.1} parent=1 // loop_exit
      _
    %659 = vsyncpa [#allocation3], 1
    %s660 = scalar_lea.sflag [#allocation3], 1
    %661 = vsyncpa %s660, 1
    %662 = vsyncpa [#allocation5], 1
    %s663 = scalar_lea.sflag [#allocation5], 1
    %664 = vsyncpa %s663, 1

// kernel: tpu_custom_call.1
$region0: #{tpu_custom_call.1}
  #allocation0 [shape = 'u32[]', space=smem, size = 0x4, offset = 0x4, fixed_abs, tag = 'smem constant byte address 0x4 - core index']
  #allocation1 [shape = 'u32[144,128]{1,0:T(1,128)}', space=vmem, size = 0x12000, scoped, tag = 'internal scratch']
  %s0 = inlined_call_operand.vmem [shape: f32[2,32,256], index: 0, kind: input, shape index: {}]
  %s1 = inlined_call_operand.vmem [shape: bf16[256,72], index: 1, kind: input, shape index: {}]
  %s2 = inlined_call_operand.vmem [shape: bf16[32,32], index: 2, kind: input, shape index: {}]
  %s3 = inlined_call_operand.vmem [shape: f32[32,1], index: 3, kind: input, shape index: {}]
  %s4 = inlined_call_operand.hbm [shape: bf16[2,8,72], index: 4, kind: output, shape index: {0}]
  %s5 = inlined_call_operand.hbm [shape: bf16[2,32,384], index: 5, kind: output, shape index: {1}]
  %6 = xla_tuple %s4, %s5
  %s7 = sld [smem:[#allocation0]]
  $region57: #{tpu_custom_call.1} parent=0
    _
  %s9 = ssub.s32 1, %s7
  %s10 = scalar_select 0, %s9, %s7
  $region1: #{tpu_custom_call.1} parent=0
    #allocation2 [shape = 'u8[4096]{0}', space=vmem, size = 0x1000, scoped, tag = 'output window, operand 0']
    #allocation3 [shape = 's32[2]{0}', space=sflag, size = 0x8, scoped, tag = 'scoped memory for tpu_custom_call.1']
    #allocation4 [shape = 'u8[49152]{0}', space=vmem, size = 0xc000, scoped, tag = 'output window, operand 1']
    #allocation5 [shape = 's32[2]{0}', space=sflag, size = 0x8, scoped, tag = 'scoped memory for tpu_custom_call.1']
    %11 = vsyncpa [#allocation3], 0
    %s12 = scalar_lea.sflag [#allocation3], 1
    %13 = vsyncpa %s12, 0
    %14 = vsyncpa [#allocation5], 0
    %s15 = scalar_lea.sflag [#allocation5], 1
    %16 = vsyncpa %s15, 0
    loop: start=0, step=1, limit=4
    $region2: #{tpu_custom_call.1} parent=1 // loop_pre_header
      _
    $region3: #{tpu_custom_call.1} parent=1 // loop_header
      %s18 = sphi 0, %s22
      %p19 = scmp.ge.s32.totalorder %s18, 4
      %s28 = sphi 0, %s30
      %s31 = sphi 0, %s28
      %s32 = sphi 0, %s31
      %s48 = sphi 0, %s32
      %s52 = sphi 0, %s52
      %s54 = sphi 0, %s52
      %s55 = sphi 0, %s54
      %s69 = sphi 0, %s55
      %s73 = sphi 0, %s73
      %s75 = sphi 0, %s73
      %s76 = sphi 0, %s75
      %s90 = sphi 0, %s76
      %s94 = sphi 0, %s94
      %s96 = sphi 0, %s94
      %s97 = sphi 0, %s96
      %s111 = sphi 0, %s97
      %s117 = sphi 0, %s119
      %s120 = sphi 0, %s117
      %s121 = sphi 0, %s120
      %s137 = sphi 0, %s121
      %s143 = sphi 0, %s145
      %s146 = sphi 0, %s143
      %s147 = sphi 0, %s146
      %s163 = sphi 0, %s147
    $region4: #{tpu_custom_call.1} parent=1 // loop_header_branch
      %21 = sbr.rel (%p19) target = $region8
    $region5: #{tpu_custom_call.1} parent=1 // loop_body
      %s23 = ssub.s32 %s18, 1
      %s24 = ssub.s32 %s18, 2
      %s25 = sadd.s32 %s18, 1
      %s26 = ssub.s32 %s18, %s25
      %p27 = scmp.eq.s32.totalorder %s26, 0
      %s29 = sadd.s32 %s28, 1
      %s30 = scalar_select %p27, %s28, %s29
      %p33 = pneg %p27
      %p34 = scmp.eq.s32.totalorder %s18, 1
      %p35 = por %p33, %p34
      %p36 = scmp.ne.s32.totalorder %s28, %s31
      %p37 = scmp.eq.s32.totalorder %s18, 0
      %p38 = por %p36, %p37
      %p39 = scmp.ne.s32.totalorder %s28, %s31
      %p40 = scmp.eq.s32.totalorder %s23, 1
      %p41 = por %p39, %p40
      %p42 = scmp.ne.s32.totalorder %s31, %s32
      %p43 = scmp.eq.s32.totalorder %s23, 0
      %p44 = por %p42, %p43
      %p45 = scmp.ne.s32.totalorder %s31, %s32
      %p46 = scmp.eq.s32.totalorder %s24, 1
      %p47 = por %p45, %p46
      %p49 = scmp.ne.s32.totalorder %s32, %s48
      %p50 = scmp.eq.s32.totalorder %s24, 0
      %p51 = por %p49, %p50
      %s53 = sadd.s32 %s52, 1
      %p56 = scmp.eq.s32.totalorder %s18, 1
      %p57 = scmp.ne.s32.totalorder %s52, %s54
      %p58 = scmp.eq.s32.totalorder %s18, 0
      %p59 = por %p57, %p58
      %p60 = scmp.ne.s32.totalorder %s52, %s54
      %p61 = scmp.eq.s32.totalorder %s23, 1
      %p62 = por %p60, %p61
      %p63 = scmp.ne.s32.totalorder %s54, %s55
      %p64 = scmp.eq.s32.totalorder %s23, 0
      %p65 = por %p63, %p64
      %p66 = scmp.ne.s32.totalorder %s54, %s55
      %p67 = scmp.eq.s32.totalorder %s24, 1
      %p68 = por %p66, %p67
      %p70 = scmp.ne.s32.totalorder %s55, %s69
      %p71 = scmp.eq.s32.totalorder %s24, 0
      %p72 = por %p70, %p71
      %s74 = sadd.s32 %s73, 1
      %p77 = scmp.eq.s32.totalorder %s18, 1
      %p78 = scmp.ne.s32.totalorder %s73, %s75
      %p79 = scmp.eq.s32.totalorder %s18, 0
      %p80 = por %p78, %p79
      %p81 = scmp.ne.s32.totalorder %s73, %s75
      %p82 = scmp.eq.s32.totalorder %s23, 1
      %p83 = por %p81, %p82
      %p84 = scmp.ne.s32.totalorder %s75, %s76
      %p85 = scmp.eq.s32.totalorder %s23, 0
      %p86 = por %p84, %p85
      %p87 = scmp.ne.s32.totalorder %s75, %s76
      %p88 = scmp.eq.s32.totalorder %s24, 1
      %p89 = por %p87, %p88
      %p91 = scmp.ne.s32.totalorder %s76, %s90
      %p92 = scmp.eq.s32.totalorder %s24, 0
      %p93 = por %p91, %p92
      %s95 = sadd.s32 %s94, 1
      %p98 = scmp.eq.s32.totalorder %s18, 1
      %p99 = scmp.ne.s32.totalorder %s94, %s96
      %p100 = scmp.eq.s32.totalorder %s18, 0
      %p101 = por %p99, %p100
      %p102 = scmp.ne.s32.totalorder %s94, %s96
      %p103 = scmp.eq.s32.totalorder %s23, 1
      %p104 = por %p102, %p103
      %p105 = scmp.ne.s32.totalorder %s96, %s97
      %p106 = scmp.eq.s32.totalorder %s23, 0
      %p107 = por %p105, %p106
      %p108 = scmp.ne.s32.totalorder %s96, %s97
      %p109 = scmp.eq.s32.totalorder %s24, 1
      %p110 = por %p108, %p109
      %p112 = scmp.ne.s32.totalorder %s97, %s111
      %p113 = scmp.eq.s32.totalorder %s24, 0
      %p114 = por %p112, %p113
      %s115 = ssub.s32 %s18, %s25
      %p116 = scmp.eq.s32.totalorder %s115, 0
      %s118 = sadd.s32 %s117, 1
      %s119 = scalar_select %p116, %s117, %s118
      %p122 = pneg %p116
      %p123 = scmp.eq.s32.totalorder %s18, 1
      %p124 = por %p122, %p123
      %p125 = scmp.ne.s32.totalorder %s117, %s120
      %p126 = scmp.eq.s32.totalorder %s18, 0
      %p127 = por %p125, %p126
      %p128 = scmp.ne.s32.totalorder %s117, %s120
      %p129 = scmp.eq.s32.totalorder %s23, 1
      %p130 = por %p128, %p129
      %p131 = scmp.ne.s32.totalorder %s120, %s121
      %p132 = scmp.eq.s32.totalorder %s23, 0
      %p133 = por %p131, %p132
      %p134 = scmp.ne.s32.totalorder %s120, %s121
      %p135 = scmp.eq.s32.totalorder %s24, 1
      %p136 = por %p134, %p135
      %p138 = scmp.ne.s32.totalorder %s121, %s137
      %p139 = scmp.eq.s32.totalorder %s24, 0
      %p140 = por %p138, %p139
      %s141 = ssub.s32 %s18, %s25
      %p142 = scmp.eq.s32.totalorder %s141, 0
      %s144 = sadd.s32 %s143, 1
      %s145 = scalar_select %p142, %s143, %s144
      %p148 = pneg %p142
      %p149 = scmp.eq.s32.totalorder %s18, 1
      %p150 = por %p148, %p149
      %p151 = scmp.ne.s32.totalorder %s143, %s146
      %p152 = scmp.eq.s32.totalorder %s18, 0
      %p153 = por %p151, %p152
      %p154 = scmp.ne.s32.totalorder %s143, %s146
      %p155 = scmp.eq.s32.totalorder %s23, 1
      %p156 = por %p154, %p155
      %p157 = scmp.ne.s32.totalorder %s146, %s147
      %p158 = scmp.eq.s32.totalorder %s23, 0
      %p159 = por %p157, %p158
      %p160 = scmp.ne.s32.totalorder %s146, %s147
      %p161 = scmp.eq.s32.totalorder %s24, 1
      %p162 = por %p160, %p161
      %p164 = scmp.ne.s32.totalorder %s147, %s163
      %p165 = scmp.eq.s32.totalorder %s24, 0
      %p166 = por %p164, %p165
      %p167 = scmp.le.s32.totalorder 1, %s18
      %p168 = scmp.lt.s32.totalorder %s18, 3
      %p169 = pnand %p167, %p168
      %p170 = pneg %p169
      // Predicated region
      $region9: #{tpu_custom_call.1} parent=5 // pred_check
        _
      $region10: #{tpu_custom_call.1} parent=5 // pred_check_branch
        %172 = sbr.rel (%p169) target = $region12
      $region11: #{tpu_custom_call.1} parent=5 // pred_region
        %s173 = ssub.s32 %s18, 1
        // Predicated region
        $region13: #{tpu_custom_call.1} parent=11 // pred_check
          %p174 = pneg %p65
        $region14: #{tpu_custom_call.1} parent=11 // pred_check_branch
          %176 = sbr.rel (%p174) target = $region16
        $region15: #{tpu_custom_call.1} parent=11 // pred_region
          _
        $region16: #{tpu_custom_call.1} parent=11 // pred_fallthru
          _
        // Predicated region
        $region17: #{tpu_custom_call.1} parent=11 // pred_check
          %p177 = pneg %p86
        $region18: #{tpu_custom_call.1} parent=11 // pred_check_branch
          %179 = sbr.rel (%p177) target = $region20
        $region19: #{tpu_custom_call.1} parent=11 // pred_region
          _
        $region20: #{tpu_custom_call.1} parent=11 // pred_fallthru
          _
        // Predicated region
        $region21: #{tpu_custom_call.1} parent=11 // pred_check
          %p180 = pneg %p107
        $region22: #{tpu_custom_call.1} parent=11 // pred_check_branch
          %182 = sbr.rel (%p180) target = $region24
        $region23: #{tpu_custom_call.1} parent=11 // pred_region
          _
        $region24: #{tpu_custom_call.1} parent=11 // pred_fallthru
          _
      $region12: #{tpu_custom_call.1} parent=5 // pred_fallthru
        _
      %p183 = scmp.lt.s32.totalorder %s18, 2
      // Predicated region
      $region25: #{tpu_custom_call.1} parent=5 // pred_check
        %p184 = pneg %p183
      $region26: #{tpu_custom_call.1} parent=5 // pred_check_branch
        %186 = sbr.rel (%p184) target = $region28
      $region27: #{tpu_custom_call.1} parent=5 // pred_region
        // Predicated region
        $region29: #{tpu_custom_call.1} parent=27 // pred_check
          %p187 = pneg %p38
        $region30: #{tpu_custom_call.1} parent=27 // pred_check_branch
          %189 = sbr.rel (%p187) target = $region32
        $region31: #{tpu_custom_call.1} parent=27 // pred_region
          %p190 = scmp.lt.s32.totalorder %s18, 1
          %s191 = scalar_select %p190, %s18, 1
          %s192 = smul.addr %s191, 8
          %s193 = smul.addr %s192, 8
          %s194 = scalar_lea.vmem %s0, %s193
        $region32: #{tpu_custom_call.1} parent=27 // pred_fallthru
          _
      $region28: #{tpu_custom_call.1} parent=5 // pred_fallthru
        _
      %p195 = scmp.le.s32.totalorder 1, %s18
      %p196 = scmp.lt.s32.totalorder %s18, 3
      %p197 = pnand %p195, %p196
      %p198 = pneg %p197
      // Predicated region
      $region33: #{tpu_custom_call.1} parent=5 // pred_check
        _
      $region34: #{tpu_custom_call.1} parent=5 // pred_check_branch
        %200 = sbr.rel (%p197) target = $region36
      $region35: #{tpu_custom_call.1} parent=5 // pred_region
        %s201 = ssub.s32 %s18, 1
        %p202 = scmp.lt.s32.totalorder %s23, 1
        %s203 = scalar_select %p202, %s23, 1
        %s204 = smul.addr %s203, 8
        %s205 = smul.addr %s204, 8
        %s206 = scalar_lea.vmem %s0, %s205
        %p207 = pneg %p44
        %p208 = pneg %p41
        %p209 = pneg %p65
        %p210 = pneg %p62
        %p211 = pneg %p86
        %p212 = pneg %p83
        %p213 = pneg %p107
        %p214 = pneg %p104
        %p215 = pneg %p133
        %p216 = pneg %p130
        %s217 = sand.u32 %s120, 1
        %s218 = scalar_lea.sflag [#allocation3], %s217
        %s219 = sand.u32 %s120, 1
        %s220 = smul.addr %s219, 4
        %s221 = scalar_lea.vmem [#allocation2], %s220
        %p222 = pneg %p159
        %p223 = pneg %p156
        %s224 = sand.u32 %s146, 1
        %s225 = scalar_lea.sflag [#allocation5], %s224
        %s226 = sand.u32 %s146, 1
        %s227 = smul.addr %s226, 48
        %s228 = scalar_lea.vmem [#allocation4], %s227
        %p229 = scmp.lt.s32.totalorder %s23, 1
        %s230 = scalar_select %p229, %s23, 1
        %s231 = smul.addr %s230, 8
        %s232 = smul.addr %s231, 8
        %s233 = scalar_lea.vmem %s0, %s232
        %v235 = vld [vmem:[%s233] sm:$0xff]
        %v236 = vld [vmem:[%s233 + $0x8] sm:$0xff]
        %v237 = vld [vmem:[%s233 + $0x10] sm:$0xff]
        %v238 = vld [vmem:[%s233 + $0x18] sm:$0xff]
        %v239 = vld [vmem:[%s233 + $0x20] sm:$0xff]
        %v240 = vld [vmem:[%s233 + $0x28] sm:$0xff]
        %v241 = vld [vmem:[%s233 + $0x30] sm:$0xff]
        %v242 = vld [vmem:[%s233 + $0x38] sm:$0xff]
        %v243 = vpack.c.bf16 %v237, %v235
        %v244 = vpack.c.bf16 %v238, %v236
        %v245 = vpack.c.bf16 %v241, %v239
        %v246 = vpack.c.bf16 %v242, %v240
        %247 = vst [vmem:[%s228] sm:$0xff] 0
        %248 = vst [vmem:[%s228 + $0x8] sm:$0xf] 0
        %249 = vst [vmem:[%s228 + $0xc] sm:$0xff] 0
        %250 = vst [vmem:[%s228 + $0x14] sm:$0xf] 0
        %251 = vst [vmem:[%s228 + $0x18] sm:$0xff] 0
        %252 = vst [vmem:[%s228 + $0x20] sm:$0xf] 0
        %253 = vst [vmem:[%s228 + $0x24] sm:$0xff] 0
        %254 = vst [vmem:[%s228 + $0x2c] sm:$0xf] 0
        %v259 = vunpack.c.l.b16 %v243
        %v260 = vunpack.c.l.b16 %v244
        %v261 = vunpack.c.h.b16 %v243
        %v262 = vunpack.c.h.b16 %v244
        %v263 = vunpack.c.l.b16 %v245
        %v264 = vunpack.c.l.b16 %v246
        %v265 = vunpack.c.h.b16 %v245
        %v266 = vunpack.c.h.b16 %v246
        %v267 = vpack.c.b16 %v260, %v259
        %v268 = vpack.c.b16 %v262, %v261
        %v269 = vpack.c.b16 %v264, %v263
        %v270 = vpack.c.b16 %v266, %v265
        %271 = vrot.lane.b32.xlu0 %v267, 17
        %v272 = vpop.permute.xlu0 %271
        %273 = vrot.lane.b32.xlu0 %v268, 17
        %v274 = vpop.permute.xlu0 %273
        %275 = vrot.lane.b32.xlu0 %v269, 17
        %v276 = vpop.permute.xlu0 %275
        %277 = vrot.lane.b32.xlu0 %v270, 17
        %v278 = vpop.permute.xlu0 %277
        %v279 = vrot.slane %v272, 4
        %v280 = vrot.slane %v274, 4
        %v281 = vrot.slane %v276, 4
        %v282 = vrot.slane %v278, 4
        %vm283 = vcmask 138240
        %v284 = vsel %vm283, %v279, %v272
        %v285 = vsel %vm283, %v280, %v274
        %v286 = vsel %vm283, %v281, %v276
        %v287 = vsel %vm283, %v282, %v278
        %vm296 = vcmask 1043592
        %vm297 = vcmask 1047556
        %vm298 = vmor %vm297, %vm296
        %299 = vst.msk [vmem:[%s228] sm:$0xff] %vm298, %v284
        %vm300 = vcmask 134144
        %301 = vst.msk [vmem:[%s228 + $0x8] sm:$0xf] %vm300, %v279
        %302 = vst.msk [vmem:[%s228 + $0xc] sm:$0xff] %vm298, %v285
        %303 = vst.msk [vmem:[%s228 + $0x14] sm:$0xf] %vm300, %v280
        %304 = vst.msk [vmem:[%s228 + $0x18] sm:$0xff] %vm298, %v286
        %305 = vst.msk [vmem:[%s228 + $0x20] sm:$0xf] %vm300, %v281
        %306 = vst.msk [vmem:[%s228 + $0x24] sm:$0xff] %vm298, %v287
        %307 = vst.msk [vmem:[%s228 + $0x2c] sm:$0xf] %vm300, %v282
        %v308 = vld [vmem:[%s1] sm:$0xf]
        %v309 = vld [vmem:[%s1 + $0x4] sm:$0xf]
        %v310 = vld [vmem:[%s1 + $0x8] sm:$0xf]
        %v311 = vld [vmem:[%s1 + $0xc] sm:$0xf]
        %v312 = vld [vmem:[%s1 + $0x10] sm:$0xf]
        %v313 = vld [vmem:[%s1 + $0x14] sm:$0xf]
        %v314 = vld [vmem:[%s1 + $0x18] sm:$0xf]
        %v315 = vld [vmem:[%s1 + $0x1c] sm:$0xf]
        %v316 = vld [vmem:[%s1 + $0x20] sm:$0xf]
        %v317 = vld [vmem:[%s1 + $0x24] sm:$0xf]
        %v318 = vld [vmem:[%s1 + $0x28] sm:$0xf]
        %v319 = vld [vmem:[%s1 + $0x2c] sm:$0xf]
        %v320 = vld [vmem:[%s1 + $0x30] sm:$0xf]
        %v321 = vld [vmem:[%s1 + $0x34] sm:$0xf]
        %v322 = vld [vmem:[%s1 + $0x38] sm:$0xf]
        %v323 = vld [vmem:[%s1 + $0x3c] sm:$0xf]
        %v324 = vld [vmem:[%s1 + $0x40] sm:$0xf]
        %v325 = vld [vmem:[%s1 + $0x44] sm:$0xf]
        %v326 = vld [vmem:[%s1 + $0x48] sm:$0xf]
        %v327 = vld [vmem:[%s1 + $0x4c] sm:$0xf]
        %v328 = vld [vmem:[%s1 + $0x50] sm:$0xf]
        %v329 = vld [vmem:[%s1 + $0x54] sm:$0xf]
        %v330 = vld [vmem:[%s1 + $0x58] sm:$0xf]
        %v331 = vld [vmem:[%s1 + $0x5c] sm:$0xf]
        %v332 = vld [vmem:[%s1 + $0x60] sm:$0xf]
        %v333 = vld [vmem:[%s1 + $0x64] sm:$0xf]
        %v334 = vld [vmem:[%s1 + $0x68] sm:$0xf]
        %v335 = vld [vmem:[%s1 + $0x6c] sm:$0xf]
        %v336 = vld [vmem:[%s1 + $0x70] sm:$0xf]
        %v337 = vld [vmem:[%s1 + $0x74] sm:$0xf]
        %v338 = vld [vmem:[%s1 + $0x78] sm:$0xf]
        %v339 = vld [vmem:[%s1 + $0x7c] sm:$0xf]
        %v372 = vunpack.c.l.b16 %v308
        %v373 = vunpack.c.l.b16 %v309
        %v374 = vunpack.c.l.b16 %v310
        %v375 = vunpack.c.l.b16 %v311
        %v376 = vunpack.c.l.b16 %v312
        %v377 = vunpack.c.l.b16 %v313
        %v378 = vunpack.c.l.b16 %v314
        %v379 = vunpack.c.l.b16 %v315
        %v380 = vunpack.c.l.b16 %v316
        %v381 = vunpack.c.l.b16 %v317
        %v382 = vunpack.c.l.b16 %v318
        %v383 = vunpack.c.l.b16 %v319
        %v384 = vunpack.c.l.b16 %v320
        %v385 = vunpack.c.l.b16 %v321
        %v386 = vunpack.c.l.b16 %v322
        %v387 = vunpack.c.l.b16 %v323
        %v388 = vunpack.c.l.b16 %v324
        %v389 = vunpack.c.l.b16 %v325
        %v390 = vunpack.c.l.b16 %v326
        %v391 = vunpack.c.l.b16 %v327
        %v392 = vunpack.c.l.b16 %v328
        %v393 = vunpack.c.l.b16 %v329
        %v394 = vunpack.c.l.b16 %v330
        %v395 = vunpack.c.l.b16 %v331
        %v396 = vunpack.c.l.b16 %v332
        %v397 = vunpack.c.l.b16 %v333
        %v398 = vunpack.c.l.b16 %v334
        %v399 = vunpack.c.l.b16 %v335
        %v400 = vunpack.c.l.b16 %v336
        %v401 = vunpack.c.l.b16 %v337
        %v402 = vunpack.c.l.b16 %v338
        %v403 = vunpack.c.l.b16 %v339
        %v404 = vpack.c.b16 %v373, %v372
        %v405 = vpack.c.b16 %v375, %v374
        %v406 = vpack.c.b16 %v377, %v376
        %v407 = vpack.c.b16 %v379, %v378
        %v408 = vpack.c.b16 %v381, %v380
        %v409 = vpack.c.b16 %v383, %v382
        %v410 = vpack.c.b16 %v385, %v384
        %v411 = vpack.c.b16 %v387, %v386
        %v412 = vpack.c.b16 %v389, %v388
        %v413 = vpack.c.b16 %v391, %v390
        %v414 = vpack.c.b16 %v393, %v392
        %v415 = vpack.c.b16 %v395, %v394
        %v416 = vpack.c.b16 %v397, %v396
        %v417 = vpack.c.b16 %v399, %v398
        %v418 = vpack.c.b16 %v401, %v400
        %v419 = vpack.c.b16 %v403, %v402
        %436 = vmatprep.subr.bf16.mxu0 0
        %437 = vmatpush1.bf16.msra.mxu0 %v411
        %438 = vmatprep.subr.bf16.mxu0 0
        %439 = vmatpush1.bf16.msra.mxu0 %v410
        %440 = vmatprep.subr.bf16.mxu0 0
        %441 = vmatpush1.bf16.msra.mxu0 %v409
        %442 = vmatprep.subr.bf16.mxu0 0
        %443 = vmatpush1.bf16.msra.mxu0 %v408
        %444 = vmatprep.subr.bf16.mxu0 0
        %445 = vmatpush1.bf16.msra.mxu0 %v407
        %446 = vmatprep.subr.bf16.mxu0 0
        %447 = vmatpush1.bf16.msra.mxu0 %v406
        %448 = vmatprep.subr.bf16.mxu0 0
        %449 = vmatpush1.bf16.msra.mxu0 %v405
        %450 = vmatprep.subr.bf16.mxu0 0
        %451 = vmatpush1.bf16.msra.mxu0 %v404
        %452 = vmatprep.subr.bf16.mxu0 0
        %453 = vmatpush2.bf16.msra.mxu0 %v419
        %454 = vmatprep.subr.bf16.mxu0 0
        %455 = vmatpush2.bf16.msra.mxu0 %v418
        %456 = vmatprep.subr.bf16.mxu0 0
        %457 = vmatpush2.bf16.msra.mxu0 %v417
        %458 = vmatprep.subr.bf16.mxu0 0
        %459 = vmatpush2.bf16.msra.mxu0 %v416
        %460 = vmatprep.subr.bf16.mxu0 0
        %461 = vmatpush2.bf16.msra.mxu0 %v415
        %462 = vmatprep.subr.bf16.mxu0 0
        %463 = vmatpush2.bf16.msra.mxu0 %v414
        %464 = vmatprep.subr.bf16.mxu0 0
        %465 = vmatpush2.bf16.msra.mxu0 %v413
        %466 = vmatprep.subr.bf16.mxu0 0
        %467 = vmatpush2.bf16.msra.mxu0 %v412
        %468 = vmatprep.mubr.bf16.mxu0 %v244
        %469 = vmatmul.mubr.bf16.gmra.mxu0 %v243
        %v470 = vpop.f32.mrf.mxu0
        %v471 = vadd.f32 0.0, %v470
        %v472 = vpop.f32.mrf.mxu0
        %v473 = vpop.f32.mrf.mxu0
        %v474 = vadd.f32 0.0, %v473
        %v475 = vpop.f32.mrf.mxu0
        %476 = vmatprep.mubr.bf16.mxu0 %v246
        %477 = vmatmul.mubr.bf16.gmra.mxu0 %v245
        %v478 = vpop.f32.mrf.mxu0
        %v479 = vadd.f32 0.0, %v478
        %v480 = vpop.f32.mrf.mxu0
        %v481 = vpop.f32.mrf.mxu0
        %v482 = vadd.f32 0.0, %v481
        %v483 = vpop.f32.mrf.mxu0
        %484 = vdwg.mxu0
        %v485 = vld [vmem:[%s2] sm:$0xf]
        %v486 = vld [vmem:[%s2 + $0x4] sm:$0xf]
        %v487 = vld [vmem:[%s2 + $0x8] sm:$0xf]
        %v488 = vld [vmem:[%s2 + $0xc] sm:$0xf]
        %v489 = vpack.c.bf16 %v474, %v471
        %v490 = vpack.c.bf16 %v482, %v479
        %v491 = vld [vmem:[%s3] sm:$0xff]
        %v492 = vld [vmem:[%s3 + $0x8] sm:$0xff]
        %v493 = vld [vmem:[%s3 + $0x10] sm:$0xff]
        %v494 = vld [vmem:[%s3 + $0x18] sm:$0xff]
        %496 = vset.pattern.permute.xlu0 0
        %497 = vperm.xlu0 %496, %v491
        %v498 = vpop.permute.xlu0 %497
        %501 = vset.pattern.permute.xlu0 0
        %502 = vperm.xlu0 %501, %v492
        %v503 = vpop.permute.xlu0 %502
        %506 = vset.pattern.permute.xlu0 0
        %507 = vperm.xlu0 %506, %v493
        %v508 = vpop.permute.xlu0 %507
        %511 = vset.pattern.permute.xlu0 0
        %512 = vperm.xlu0 %511, %v494
        %v513 = vpop.permute.xlu0 %512
        %v519 = vunpack.c.l.b16 %v485
        %v520 = vunpack.c.l.b16 %v486
        %v521 = vunpack.c.l.b16 %v487
        %v522 = vunpack.c.l.b16 %v488
        %v523 = vpack.c.b16 %v520, %v519
        %v524 = vpack.c.b16 %v522, %v521
        %vm525 = vcmask 261120
        %v527 = vsel %vm525, %v523, 0
        %v530 = vsel %vm525, %v524, 0
        %532 = vmatprep.subr.bf16.mxu0 0
        %533 = vmatpush1.bf16.msra.mxu0 0
        %534 = vmatprep.subr.bf16.mxu0 0
        %535 = vmatpush1.bf16.msra.mxu0 0
        %536 = vmatprep.subr.bf16.mxu0 0
        %537 = vmatpush1.bf16.msra.mxu0 0
        %538 = vmatprep.subr.bf16.mxu0 0
        %539 = vmatpush1.bf16.msra.mxu0 0
        %540 = vmatprep.subr.bf16.mxu0 0
        %541 = vmatpush1.bf16.msra.mxu0 0
        %542 = vmatprep.subr.bf16.mxu0 0
        %543 = vmatpush1.bf16.msra.mxu0 0
        %544 = vmatprep.subr.bf16.mxu0 0
        %545 = vmatpush1.bf16.msra.mxu0 %v490
        %546 = vmatprep.subr.bf16.mxu0 0
        %547 = vmatpush1.bf16.msra.mxu0 %v489
        %548 = vmatprep.subr.bf16.mxu0 0
        %549 = vmatpush2.bf16.msra.mxu0 0
        %550 = vmatprep.subr.bf16.mxu0 0
        %551 = vmatpush2.bf16.msra.mxu0 0
        %552 = vmatprep.subr.bf16.mxu0 0
        %553 = vmatpush2.bf16.msra.mxu0 0
        %554 = vmatprep.subr.bf16.mxu0 0
        %555 = vmatpush2.bf16.msra.mxu0 0
        %556 = vmatprep.subr.bf16.mxu0 0
        %557 = vmatpush2.bf16.msra.mxu0 0
        %558 = vmatprep.subr.bf16.mxu0 0
        %559 = vmatpush2.bf16.msra.mxu0 0
        %560 = vmatprep.subr.bf16.mxu0 0
        %561 = vmatpush2.bf16.msra.mxu0 0
        %562 = vmatprep.subr.bf16.mxu0 0
        %563 = vmatpush2.bf16.msra.mxu0 0
        %564 = vmatprep.mubr.bf16.mxu0 0
        %565 = vmatmul.mubr.bf16.gmra.mxu0 %v527
        %v566 = vpop.f32.mrf.mxu0
        %v567 = vadd.f32 %v498, %v566
        %v568 = vpop.f32.mrf.mxu0
        %v569 = vpop.f32.mrf.mxu0
        %v570 = vadd.f32 %v503, %v569
        %v571 = vpop.f32.mrf.mxu0
        %572 = vmatprep.mubr.bf16.mxu0 0
        %573 = vmatmul.mubr.bf16.gmra.mxu0 %v530
        %v574 = vpop.f32.mrf.mxu0
        %v575 = vadd.f32 %v508, %v574
        %v576 = vpop.f32.mrf.mxu0
        %v577 = vpop.f32.mrf.mxu0
        %v578 = vadd.f32 %v513, %v577
        %v579 = vpop.f32.mrf.mxu0
        %580 = vdwg.mxu0
        %v581 = vmax.f32 %v567, 0.0
        %v582 = vmax.f32 %v570, 0.0
        %v583 = vmax.f32 %v575, 0.0
        %v584 = vmax.f32 %v578, 0.0
        %v585 = vpack.c.bf16 %v581, %v581
        %vm586 = vcmask 60416
        %587 = vst.msk [vmem:[%s221] sm:$0xf] %vm586, %v585
        %v588 = vpack.c.bf16 %v582, %v582
        %vm589 = vcmask 126016
        %590 = vst.msk [vmem:[%s221] sm:$0xf] %vm589, %v588
        %v591 = vpack.c.bf16 %v583, %v583
        %vm592 = vcmask 257152
        %593 = vst.msk [vmem:[%s221] sm:$0xf] %vm592, %v591
        %v594 = vpack.c.bf16 %v584, %v584
        %vm595 = vcmask 584960
        %596 = vst.msk [vmem:[%s221] sm:$0xf] %vm595, %v594
        %s597 = sand.u32 %s120, 1
        %s598 = scalar_lea.sflag [#allocation3], %s597
        %s599 = sand.u32 %s120, 1
        %s600 = smul.addr %s599, 4
        %s601 = scalar_lea.vmem [#allocation2], %s600
        %s602 = sand.u32 %s146, 1
        %s603 = scalar_lea.sflag [#allocation5], %s602
        %s604 = sand.u32 %s146, 1
        %s605 = smul.addr %s604, 48
        %s606 = scalar_lea.vmem [#allocation4], %s605
        // Predicated region
        $region37: #{tpu_custom_call.1} parent=35 // pred_check
          %p607 = pneg %p130
        $region38: #{tpu_custom_call.1} parent=35 // pred_check_branch
          %609 = sbr.rel (%p607) target = $region40
        $region39: #{tpu_custom_call.1} parent=35 // pred_region
          %s611 = ssub.s32 64, 64
          %612 = vsyncadd %s598, %s611
          %s613 = smul.addr %s23, 64
          %s614 = scalar_lea.hbm %s4, %s613
          %s616 = sshll.u32 %s601, 4
          %s617 = int_to_ptr.vmem [resolvable:$true] %s616
          %619 = dma.vmem_to_hbm [thread:$0]  %s617, 64, %s614, %s598
        $region40: #{tpu_custom_call.1} parent=35 // pred_fallthru
          _
        // Predicated region
        $region41: #{tpu_custom_call.1} parent=35 // pred_check
          %p620 = pneg %p156
        $region42: #{tpu_custom_call.1} parent=35 // pred_check_branch
          %622 = sbr.rel (%p620) target = $region44
        $region43: #{tpu_custom_call.1} parent=35 // pred_region
          %s624 = ssub.s32 768, 768
          %625 = vsyncadd %s603, %s624
          %s626 = smul.addr %s23, 12
          %s627 = smul.addr %s626, 64
          %s628 = scalar_lea.hbm %s5, %s627
          %s629 = sshll.u32 %s606, 4
          %s630 = int_to_ptr.vmem [resolvable:$true] %s629
          %635 = dma.vmem_to_hbm [thread:$0]  %s630, 768, %s628, %s603, 192, 192, 12
        $region44: #{tpu_custom_call.1} parent=35 // pred_fallthru
          _
      $region36: #{tpu_custom_call.1} parent=5 // pred_fallthru
        _
      %p636 = scmp.le.s32.totalorder 2, %s18
      // Predicated region
      $region45: #{tpu_custom_call.1} parent=5 // pred_check
        %p637 = pneg %p636
      $region46: #{tpu_custom_call.1} parent=5 // pred_check_branch
        %639 = sbr.rel (%p637) target = $region48
      $region47: #{tpu_custom_call.1} parent=5 // pred_region
        %s640 = ssub.s32 %s18, 2
        // Predicated region
        $region49: #{tpu_custom_call.1} parent=47 // pred_check
          %p641 = pneg %p136
        $region50: #{tpu_custom_call.1} parent=47 // pred_check_branch
          %643 = sbr.rel (%p641) target = $region52
        $region51: #{tpu_custom_call.1} parent=47 // pred_region
          %s644 = sand.u32 %s121, 1
          %s645 = scalar_lea.sflag [#allocation3], %s644
          %s646 = sand.u32 %s121, 1
          %s647 = smul.addr %s646, 4
          %s648 = scalar_lea.vmem [#allocation2], %s647
          %649 = dma.done %s645, 64
        $region52: #{tpu_custom_call.1} parent=47 // pred_fallthru
          _
        // Predicated region
        $region53: #{tpu_custom_call.1} parent=47 // pred_check
          %p650 = pneg %p162
        $region54: #{tpu_custom_call.1} parent=47 // pred_check_branch
          %652 = sbr.rel (%p650) target = $region56
        $region55: #{tpu_custom_call.1} parent=47 // pred_region
          %s653 = sand.u32 %s147, 1
          %s654 = scalar_lea.sflag [#allocation5], %s653
          %s655 = sand.u32 %s147, 1
          %s656 = smul.addr %s655, 48
          %s657 = scalar_lea.vmem [#allocation4], %s656
          %658 = dma.done %s654, 768
        $region56: #{tpu_custom_call.1} parent=47 // pred_fallthru
          _
      $region48: #{tpu_custom_call.1} parent=5 // pred_fallthru
        _
    $region6: #{tpu_custom_call.1} parent=1 // loop_footer
      %s22 = sadd.s32 1, %s18
    $region7: #{tpu_custom_call.1} parent=1 // loop_footer_branch
      %17 = sbr.rel target = $region3
    $region8: #{tpu_custom_call.1} parent=1 // loop_exit
      _
    %659 = vsyncpa [#allocation3], 1
    %s660 = scalar_lea.sflag [#allocation3], 1
    %661 = vsyncpa %s660, 1
    %662 = vsyncpa [#allocation5], 1
    %s663 = scalar_lea.sflag [#allocation5], 1
    %664 = vsyncpa %s663, 1

</llo_original>
